<compile_context>
chip_gen: v5e
topology: v5e:2x2
jax: 0.10.0
libtpu: 0.0.40
codegen_flags: <defaults>
</compile_context>

<pallas_src>
import functools

import jax
import jax.numpy as jnp
from jax.experimental import pallas as pl
from jax.experimental.pallas import tpu as pltpu


# ----------------------------------------------------------------------------
# LSTM cell elementwise math (PyTorch gate order i, f, g, o), single direction.
# Full-width sigmoid/tanh, then slice the activated vreg.
# ----------------------------------------------------------------------------
def _lstm_cell(gates, c_prev, H):
    sg = jax.nn.sigmoid(gates)          # (B, 4H)
    th = jnp.tanh(gates)                # (B, 4H)
    c_new = sg[:, H:2 * H] * c_prev + sg[:, 0:H] * th[:, 2 * H:3 * H]
    h_new = sg[:, 3 * H:4 * H] * jnp.tanh(c_new)
    return h_new, c_new


# ----------------------------------------------------------------------------
# Fully fused kernel: LSTM stack (all layers & directions) + last-step slice
# + ANN head + final activation.  Single grid point, everything VMEM-resident.
# ----------------------------------------------------------------------------
def fused_lstm_ann_kernel(*refs, T, B, H, num_layers, num_dirs,
                          num_ann_layers, use_softmax):
    bf16 = jnp.bfloat16
    f32 = jnp.float32

    # ---- parse positional refs (order must match wrapper packing) ----------
    idx = 0
    x_ref = refs[idx]; idx += 1                      # (T*B, E) bf16, row t*B+b = x[b, t]
    layer_refs = []
    for l in range(num_layers):
        if num_dirs == 2 and l < num_layers - 1:
            # combined W_ih (in, 8H), block-diag W_hh (2H, 8H), bias (1, 8H)
            layer_refs.append(("bidir_mid", refs[idx], refs[idx + 1], refs[idx + 2]))
            idx += 3
        elif num_dirs == 2:
            # fwd: W_ih (in,4H), W_hh (H,4H), b (1,4H); bwd: W_ih (in,4H), b (1,4H)
            layer_refs.append(("bidir_last", refs[idx], refs[idx + 1], refs[idx + 2],
                               refs[idx + 3], refs[idx + 4]))
            idx += 5
        else:
            layer_refs.append(("uni", refs[idx], refs[idx + 1], refs[idx + 2]))
            idx += 3
    ann_refs = []
    for _ in range(num_ann_layers):
        ann_refs.append((refs[idx], refs[idx + 1]))
        idx += 2
    out_ref = refs[idx]                              # (B, out_dim)

    # ---- LSTM stack ---------------------------------------------------------
    x_all = x_ref[...]                               # bf16 (T*B, in_l)
    feat = None
    for l, lr in enumerate(layer_refs):
        kind = lr[0]
        is_last = (l == num_layers - 1)

        if kind == "bidir_mid":
            _, w_ih_ref, w_hh_ref, b_ref = lr
            # Hoisted input projection for BOTH directions, all T steps at once.
            gx = jnp.dot(x_all, w_ih_ref[...],
                         preferred_element_type=f32) + b_ref[...]   # (T*B, 8H)
            w_hh = w_hh_ref[...]                                     # bf16 (2H, 8H) block-diag
            h_comb = jnp.zeros((B, 2 * H), f32)                      # [h_fwd | h_bwd]
            c_f = jnp.zeros((B, H), f32)
            c_b = jnp.zeros((B, H), f32)
            h_f_seq = [None] * T
            h_b_seq = [None] * T
            for s in range(T):
                tf, tb = s, T - 1 - s
                gx_step = jnp.concatenate(
                    [gx[tf * B:(tf + 1) * B, 0:4 * H],
                     gx[tb * B:(tb + 1) * B, 4 * H:8 * H]], axis=1)  # (B, 8H)
                gates = gx_step + jnp.dot(h_comb.astype(bf16), w_hh,
                                          preferred_element_type=f32)
                sg = jax.nn.sigmoid(gates)                           # (B, 8H)
                th = jnp.tanh(gates)                                 # (B, 8H)
                # forward direction (cols 0:4H, gate order i,f,g,o)
                c_f = sg[:, H:2 * H] * c_f + sg[:, 0:H] * th[:, 2 * H:3 * H]
                h_f = sg[:, 3 * H:4 * H] * jnp.tanh(c_f)
                # backward direction (cols 4H:8H)
                c_b = sg[:, 5 * H:6 * H] * c_b + sg[:, 4 * H:5 * H] * th[:, 6 * H:7 * H]
                h_b = sg[:, 7 * H:8 * H] * jnp.tanh(c_b)
                h_f_seq[tf] = h_f
                h_b_seq[tb] = h_b
                h_comb = jnp.concatenate([h_f, h_b], axis=1)
            # Next-layer input sequence, assembled once (no masked scratch stores).
            x_all = jnp.concatenate(
                [jnp.concatenate([h_f_seq[t], h_b_seq[t]], axis=1) for t in range(T)],
                axis=0).astype(bf16)                                 # (T*B, 2H)

        elif kind == "bidir_last":
            _, wif_ref, whf_ref, bf_ref, wib_ref, bb_ref = lr
            # Forward direction: full recurrence (only h at t = T-1 is consumed).
            gxf = jnp.dot(x_all, wif_ref[...],
                          preferred_element_type=f32) + bf_ref[...]  # (T*B, 4H)
            whf = whf_ref[...]
            h = jnp.zeros((B, H), f32)
            c = jnp.zeros((B, H), f32)
            for t in range(T):
                gates = gxf[t * B:(t + 1) * B, :] + jnp.dot(
                    h.astype(bf16), whf, preferred_element_type=f32)
                h, c = _lstm_cell(gates, c, H)
            # Backward direction: lstm_out[:, -1, H:2H] is the state after
            # processing only x[T-1] from a zero state (h0=c0=0 => h@W_hh == 0),
            # so project just the last timestep and run one cell step.
            # NOTE: valid only because initial states are zero and only the last
            # timestep of lstm_out is consumed by this model.
            gb = jnp.dot(x_all[(T - 1) * B:T * B, :], wib_ref[...],
                         preferred_element_type=f32) + bb_ref[...]
            h_b, _ = _lstm_cell(gb, jnp.zeros((B, H), f32), H)
            feat = jnp.concatenate([h, h_b], axis=1)                 # (B, 2H)

        else:  # unidirectional layer
            _, w_ih_ref, w_hh_ref, b_ref = lr
            gx = jnp.dot(x_all, w_ih_ref[...],
                         preferred_element_type=f32) + b_ref[...]    # (T*B, 4H)
            w_hh = w_hh_ref[...]
            h = jnp.zeros((B, H), f32)
            c = jnp.zeros((B, H), f32)
            h_seq = []
            for t in range(T):
                gates = gx[t * B:(t + 1) * B, :] + jnp.dot(
                    h.astype(bf16), w_hh, preferred_element_type=f32)
                h, c = _lstm_cell(gates, c, H)
                h_seq.append(h)
            if is_last:
                feat = h
            else:
                x_all = jnp.concatenate(h_seq, axis=0).astype(bf16)  # (T*B, H)

    # ---- ANN head (simpleDenseModel) + final activation (f32) ---------------
    a = feat
    for j, (w_ref, b_ref) in enumerate(ann_refs):
        a = jnp.dot(a, w_ref[...], preferred_element_type=f32) + b_ref[...]
        if j < num_ann_layers - 1:
            a = jnp.maximum(a, 0.0)                  # ReLU between layers
    if use_softmax:
        e = jnp.exp(a - jnp.max(a, axis=-1, keepdims=True))
        a = e / jnp.sum(e, axis=-1, keepdims=True)   # exact (off the hot path)
    else:
        a = jax.nn.sigmoid(a)
    out_ref[...] = a.astype(out_ref.dtype)


# ----------------------------------------------------------------------------
# Wrapper: embedding gather (glue, plain JAX) + single fused pallas_call.
# ----------------------------------------------------------------------------
def lstm_ann_forward(token_ids, params):
    emb = params["embedding"]
    B, T = token_ids.shape
    lstm = params["lstm"]
    L = len(lstm)
    D = len(lstm[0])
    H = lstm[0][0]["w_hh_t"].shape[0]
    ann_w, ann_b = params["ann_w"], params["ann_b"]
    out_dim = ann_w[-1].shape[1]
    bf16 = jnp.bfloat16

    # TODO(synk): the embedding gather could be fused (scalar-prefetch ids +
    # DMA row gather); negligible at these sizes, kept as wrapper glue.
    ids_tm = token_ids.T.reshape(-1)                 # (T*B,), row t*B+b = x[b, t]
    x2d = emb[ids_tm].astype(bf16)                   # (T*B, E) bf16 MXU operand

    args = [x2d]
    for l, layer in enumerate(lstm):
        if D == 2 and l < L - 1:
            pf, pb = layer
            # Combined input projection for both directions (same input sequence).
            w_ih_comb = jnp.concatenate([pf["w_ih_t"], pb["w_ih_t"]], axis=1)   # (in, 8H)
            # Block-diagonal recurrent weight: [h_f | h_b] @ W -> [gates_f | gates_b].
            w_hh_bd = jnp.zeros((2 * H, 8 * H), jnp.float32)
            w_hh_bd = w_hh_bd.at[0:H, 0:4 * H].set(pf["w_hh_t"])
            w_hh_bd = w_hh_bd.at[H:2 * H, 4 * H:8 * H].set(pb["w_hh_t"])
            b_comb = jnp.concatenate([pf["bias"], pb["bias"]])[None, :]         # (1, 8H)
            args += [w_ih_comb.astype(bf16), w_hh_bd.astype(bf16), b_comb]
        elif D == 2:
            pf, pb = layer
            args += [pf["w_ih_t"].astype(bf16), pf["w_hh_t"].astype(bf16),
                     pf["bias"][None, :],
                     pb["w_ih_t"].astype(bf16), pb["bias"][None, :]]
        else:
            p = layer[0]
            args += [p["w_ih_t"].astype(bf16), p["w_hh_t"].astype(bf16),
                     p["bias"][None, :]]
    for w, b in zip(ann_w, ann_b):
        args += [w, b[None, :]]                      # ANN stays f32 (tiny, one-off)

    kernel = functools.partial(
        fused_lstm_ann_kernel, T=T, B=B, H=H, num_layers=L, num_dirs=D,
        num_ann_layers=len(ann_w), use_softmax=params["use_softmax"])

    vmem_spec = pl.BlockSpec(memory_space=pltpu.MemorySpace.VMEM)
    return pl.pallas_call(
        kernel,
        out_shape=jax.ShapeDtypeStruct((B, out_dim), jnp.float32),
        in_specs=[vmem_spec] * len(args),
        out_specs=vmem_spec,
        compiler_params=pltpu.CompilerParams(
            vmem_limit_bytes=32 * 1024 * 1024),      # explicit; footprint is tiny here
    )(*args)


# ----------------------------------------------------------------------------
# Pure-JAX reference (mirrors PyTorch forward) for a correctness check.
# ----------------------------------------------------------------------------
def _ref_cell(gates, c_prev, H):
    i_g = jax.nn.sigmoid(gates[:, 0 * H:1 * H])
    f_g = jax.nn.sigmoid(gates[:, 1 * H:2 * H])
    g_g = jnp.tanh(gates[:, 2 * H:3 * H])
    o_g = jax.nn.sigmoid(gates[:, 3 * H:4 * H])
    c_new = f_g * c_prev + i_g * g_g
    h_new = o_g * jnp.tanh(c_new)
    return h_new, c_new


def reference_forward(token_ids, params):
    mm = lambda a, b: jnp.dot(a, b, precision=jax.lax.Precision.HIGHEST)
    x = params["embedding"][token_ids]               # (B, T, E)
    B, T, _ = x.shape
    seq = jnp.transpose(x, (1, 0, 2))                # (T, B, E)
    for layer in params["lstm"]:
        outs = []
        for d, p in enumerate(layer):
            Hh = p["w_hh_t"].shape[0]
            h = jnp.zeros((B, Hh), jnp.float32)
            c = jnp.zeros((B, Hh), jnp.float32)
            hs = []
            order = range(T) if d == 0 else range(T - 1, -1, -1)
            for t in order:
                g = mm(seq[t], p["w_ih_t"]) + mm(h, p["w_hh_t"]) + p["bias"]
                h, c = _ref_cell(g, c, Hh)
                hs.append(h)
            if d == 1:
                hs = hs[::-1]
            outs.append(jnp.stack(hs))               # (T, B, H)
        seq = jnp.concatenate(outs, axis=-1)
    h = seq[-1]                                      # lstm_out[:, -1, :]
    n = len(params["ann_w"])
    for j, (w, b) in enumerate(zip(params["ann_w"], params["ann_b"])):
        h = mm(h, w) + b
        if j < n - 1:
            h = jnp.maximum(h, 0.0)
    return jax.nn.softmax(h, axis=-1) if params["use_softmax"] else jax.nn.sigmoid(h)


# ----------------------------------------------------------------------------
# Parameter construction (deterministic, matches nn.Module __init__ shapes).
# ----------------------------------------------------------------------------
def init_params(key, vocab_size, embedding_dim, pad_idx, hidden, num_layers,
                bidirectional, ann_output_size, num_ann_layers, numFirst):
    num_dirs = 2 if bidirectional else 1
    keys = jax.random.split(key, 64)
    k_it = iter(keys)

    # Embedding: N(0,1), padding row zeroed (forward-equivalent to padding_idx).
    emb = jax.random.normal(next(k_it), (vocab_size, embedding_dim), jnp.float32)
    emb = emb.at[pad_idx].set(0.0)

    bound = 1.0 / jnp.sqrt(jnp.float32(hidden))
    lstm_layers = []
    for layer in range(num_layers):
        in_size = embedding_dim if layer == 0 else hidden * num_dirs
        dirs = []
        for _ in range(num_dirs):
            w_ih = jax.random.uniform(next(k_it), (4 * hidden, in_size),
                                      jnp.float32, -bound, bound)
            w_hh = jax.random.uniform(next(k_it), (4 * hidden, hidden),
                                      jnp.float32, -bound, bound)
            b_ih = jax.random.uniform(next(k_it), (4 * hidden,),
                                      jnp.float32, -bound, bound)
            b_hh = jax.random.uniform(next(k_it), (4 * hidden,),
                                      jnp.float32, -bound, bound)
            dirs.append({
                "w_ih_t": w_ih.T,          # (in, 4H) for the kernel
                "w_hh_t": w_hh.T,          # (H, 4H)
                "bias": b_ih + b_hh,       # (4H,)
            })
        lstm_layers.append(dirs)

    # ANN (simpleDenseModel): in -> numFirst -> ... -> out
    ann_in = hidden * num_dirs
    dims = [ann_in] + [numFirst] * (num_ann_layers - 1) + [ann_output_size]
    ann_w, ann_b = [], []
    for l in range(num_ann_layers):
        fan_in = dims[l]
        lb = 1.0 / jnp.sqrt(jnp.float32(fan_in))
        w = jax.random.uniform(next(k_it), (dims[l + 1], fan_in),
                               jnp.float32, -lb, lb)
        b = jax.random.uniform(next(k_it), (dims[l + 1],),
                               jnp.float32, -lb, lb)
        ann_w.append(w.T)                  # (D_l, D_{l+1}) for the kernel
        ann_b.append(b)

    return {"embedding": emb, "lstm": lstm_layers,
            "ann_w": ann_w, "ann_b": ann_b,
            "use_softmax": ann_output_size > 1}


if __name__ == "__main__":
    # Small config consistent with the module's constructor.
    vocab_size = 50
    embedding_dim = 16
    pad_idx = 0
    lstm_hidden_size = 32
    lstm_num_layers = 2
    lstm_bidirectional = True
    ann_output_size = 1          # > 1 would switch final activation to Softmax
    num_ann_layers = 2
    ann_numFirst = 16

    batch, seq_len = 2, 8

    key = jax.random.PRNGKey(0)
    k_param, k_data = jax.random.split(key)
    params = init_params(k_param, vocab_size, embedding_dim, pad_idx,
                         lstm_hidden_size, lstm_num_layers, lstm_bidirectional,
                         ann_output_size, num_ann_layers, ann_numFirst)

    token_ids = jax.random.randint(k_data, (batch, seq_len), 0, vocab_size,
                                   dtype=jnp.int32)

    out = lstm_ann_forward(token_ids, params)
    out = jax.block_until_ready(out)
    assert out.shape == (batch, ann_output_size)
    assert bool(jnp.all(jnp.isfinite(out)))

    ref = jax.block_until_ready(reference_forward(token_ids, params))
    # bf16 MXU operands (per perf review) relax the tolerance vs. the f32
    # reference; outputs are sigmoid probabilities so 1e-2 is still meaningful.
    assert bool(jnp.allclose(out, ref, atol=1e-2, rtol=1e-2)), (out, ref)

    print("KERNEL_OK")
</pallas_src>

<mosaic_0001>
module attributes {stable_mosaic.version = 11 : i64} {
  func.func @fused_lstm_ann_kernel(%arg0: memref<16x16xbf16, #tpu.memory_space<vmem>>, %arg1: memref<16x256xbf16, #tpu.memory_space<vmem>>, %arg2: memref<64x256xbf16, #tpu.memory_space<vmem>>, %arg3: memref<1x256xf32, #tpu.memory_space<vmem>>, %arg4: memref<64x128xbf16, #tpu.memory_space<vmem>>, %arg5: memref<32x128xbf16, #tpu.memory_space<vmem>>, %arg6: memref<1x128xf32, #tpu.memory_space<vmem>>, %arg7: memref<64x128xbf16, #tpu.memory_space<vmem>>, %arg8: memref<1x128xf32, #tpu.memory_space<vmem>>, %arg9: memref<64x16xf32, #tpu.memory_space<vmem>>, %arg10: memref<1x16xf32, #tpu.memory_space<vmem>>, %arg11: memref<16x1xf32, #tpu.memory_space<vmem>>, %arg12: memref<1x1xf32, #tpu.memory_space<vmem>>, %arg13: memref<2x1xf32, #tpu.memory_space<vmem>>) attributes {dimension_semantics = [], scalar_prefetch = 0 : i64, scratch_operands = 0 : i64, tpu.core_type = #tpu.core_type<tc>} {
    %c0 = arith.constant 0 : index
    %c0_0 = arith.constant 0 : index
    %0 = vector.load %arg0[%c0, %c0_0] : memref<16x16xbf16, #tpu.memory_space<vmem>>, vector<16x16xbf16>
    %c0_1 = arith.constant 0 : index
    %c0_2 = arith.constant 0 : index
    %1 = vector.load %arg1[%c0_1, %c0_2] : memref<16x256xbf16, #tpu.memory_space<vmem>>, vector<16x256xbf16>
    %cst = arith.constant dense<0.000000e+00> : vector<16x256xf32>
    %2 = tpu.matmul %0, %1, %cst {dimension_numbers = #tpu.dot_dimension_numbers<[1], [0], [0], [1], [0, 0, 1, 1], [], []>} : vector<16x16xbf16>, vector<16x256xbf16>, vector<16x256xf32> -> vector<16x256xf32>
    %c0_3 = arith.constant 0 : index
    %c0_4 = arith.constant 0 : index
    %3 = vector.load %arg3[%c0_3, %c0_4] : memref<1x256xf32, #tpu.memory_space<vmem>>, vector<1x256xf32>
    %4 = vector.broadcast %3 : vector<1x256xf32> to vector<16x256xf32>
    %5 = arith.addf %2, %4 : vector<16x256xf32>
    %c0_5 = arith.constant 0 : index
    %c0_6 = arith.constant 0 : index
    %6 = vector.load %arg2[%c0_5, %c0_6] : memref<64x256xbf16, #tpu.memory_space<vmem>>, vector<64x256xbf16>
    %cst_7 = arith.constant 0.000000e+00 : f32
    %7 = vector.broadcast %cst_7 : f32 to vector<2x64xf32>
    %cst_8 = arith.constant 0.000000e+00 : f32
    %8 = vector.broadcast %cst_8 : f32 to vector<2x32xf32>
    %cst_9 = arith.constant 0.000000e+00 : f32
    %9 = vector.broadcast %cst_9 : f32 to vector<2x32xf32>
    %10 = vector.extract_strided_slice %5 {offsets = [0, 0], sizes = [2, 128], strides = [1, 1]} : vector<16x256xf32> to vector<2x128xf32>
    %11 = vector.extract_strided_slice %5 {offsets = [14, 128], sizes = [2, 128], strides = [1, 1]} : vector<16x256xf32> to vector<2x128xf32>
    %12 = tpu.concatenate %10, %11 in 1 : vector<2x128xf32>, vector<2x128xf32> -> vector<2x256xf32>
    %13 = arith.truncf %7 : vector<2x64xf32> to vector<2x64xbf16>
    %cst_10 = arith.constant dense<0.000000e+00> : vector<2x256xf32>
    %14 = tpu.matmul %13, %6, %cst_10 {dimension_numbers = #tpu.dot_dimension_numbers<[1], [0], [0], [1], [0, 0, 1, 1], [], []>} : vector<2x64xbf16>, vector<64x256xbf16>, vector<2x256xf32> -> vector<2x256xf32>
    %15 = arith.addf %12, %14 : vector<2x256xf32>
    %16 = arith.negf %15 : vector<2x256xf32>
    %17 = math.exp %16 : vector<2x256xf32>
    %cst_11 = arith.constant 1.000000e+00 : f32
    %18 = vector.broadcast %cst_11 : f32 to vector<2x256xf32>
    %19 = arith.addf %18, %17 : vector<2x256xf32>
    %20 = arith.divf %18, %19 : vector<2x256xf32>
    %21 = math.tanh %15 : vector<2x256xf32>
    %22 = vector.extract_strided_slice %20 {offsets = [0, 32], sizes = [2, 32], strides = [1, 1]} : vector<2x256xf32> to vector<2x32xf32>
    %23 = arith.mulf %22, %8 : vector<2x32xf32>
    %24 = vector.extract_strided_slice %20 {offsets = [0, 0], sizes = [2, 32], strides = [1, 1]} : vector<2x256xf32> to vector<2x32xf32>
    %25 = vector.extract_strided_slice %21 {offsets = [0, 64], sizes = [2, 32], strides = [1, 1]} : vector<2x256xf32> to vector<2x32xf32>
    %26 = arith.mulf %24, %25 : vector<2x32xf32>
    %27 = arith.addf %23, %26 : vector<2x32xf32>
    %28 = vector.extract_strided_slice %20 {offsets = [0, 96], sizes = [2, 32], strides = [1, 1]} : vector<2x256xf32> to vector<2x32xf32>
    %29 = math.tanh %27 : vector<2x32xf32>
    %30 = arith.mulf %28, %29 : vector<2x32xf32>
    %31 = vector.extract_strided_slice %20 {offsets = [0, 160], sizes = [2, 32], strides = [1, 1]} : vector<2x256xf32> to vector<2x32xf32>
    %32 = arith.mulf %31, %9 : vector<2x32xf32>
    %33 = vector.extract_strided_slice %20 {offsets = [0, 128], sizes = [2, 32], strides = [1, 1]} : vector<2x256xf32> to vector<2x32xf32>
    %34 = vector.extract_strided_slice %21 {offsets = [0, 192], sizes = [2, 32], strides = [1, 1]} : vector<2x256xf32> to vector<2x32xf32>
    %35 = arith.mulf %33, %34 : vector<2x32xf32>
    %36 = arith.addf %32, %35 : vector<2x32xf32>
    %37 = vector.extract_strided_slice %20 {offsets = [0, 224], sizes = [2, 32], strides = [1, 1]} : vector<2x256xf32> to vector<2x32xf32>
    %38 = math.tanh %36 : vector<2x32xf32>
    %39 = arith.mulf %37, %38 : vector<2x32xf32>
    %40 = tpu.concatenate %30, %39 in 1 : vector<2x32xf32>, vector<2x32xf32> -> vector<2x64xf32>
    %41 = vector.extract_strided_slice %5 {offsets = [2, 0], sizes = [2, 128], strides = [1, 1]} : vector<16x256xf32> to vector<2x128xf32>
    %42 = vector.extract_strided_slice %5 {offsets = [12, 128], sizes = [2, 128], strides = [1, 1]} : vector<16x256xf32> to vector<2x128xf32>
    %43 = tpu.concatenate %41, %42 in 1 : vector<2x128xf32>, vector<2x128xf32> -> vector<2x256xf32>
    %44 = arith.truncf %40 : vector<2x64xf32> to vector<2x64xbf16>
    %cst_12 = arith.constant dense<0.000000e+00> : vector<2x256xf32>
    %45 = tpu.matmul %44, %6, %cst_12 {dimension_numbers = #tpu.dot_dimension_numbers<[1], [0], [0], [1], [0, 0, 1, 1], [], []>} : vector<2x64xbf16>, vector<64x256xbf16>, vector<2x256xf32> -> vector<2x256xf32>
    %46 = arith.addf %43, %45 : vector<2x256xf32>
    %47 = arith.negf %46 : vector<2x256xf32>
    %48 = math.exp %47 : vector<2x256xf32>
    %cst_13 = arith.constant 1.000000e+00 : f32
    %49 = vector.broadcast %cst_13 : f32 to vector<2x256xf32>
    %50 = arith.addf %49, %48 : vector<2x256xf32>
    %51 = arith.divf %49, %50 : vector<2x256xf32>
    %52 = math.tanh %46 : vector<2x256xf32>
    %53 = vector.extract_strided_slice %51 {offsets = [0, 32], sizes = [2, 32], strides = [1, 1]} : vector<2x256xf32> to vector<2x32xf32>
    %54 = arith.mulf %53, %27 : vector<2x32xf32>
    %55 = vector.extract_strided_slice %51 {offsets = [0, 0], sizes = [2, 32], strides = [1, 1]} : vector<2x256xf32> to vector<2x32xf32>
    %56 = vector.extract_strided_slice %52 {offsets = [0, 64], sizes = [2, 32], strides = [1, 1]} : vector<2x256xf32> to vector<2x32xf32>
    %57 = arith.mulf %55, %56 : vector<2x32xf32>
    %58 = arith.addf %54, %57 : vector<2x32xf32>
    %59 = vector.extract_strided_slice %51 {offsets = [0, 96], sizes = [2, 32], strides = [1, 1]} : vector<2x256xf32> to vector<2x32xf32>
    %60 = math.tanh %58 : vector<2x32xf32>
    %61 = arith.mulf %59, %60 : vector<2x32xf32>
    %62 = vector.extract_strided_slice %51 {offsets = [0, 160], sizes = [2, 32], strides = [1, 1]} : vector<2x256xf32> to vector<2x32xf32>
    %63 = arith.mulf %62, %36 : vector<2x32xf32>
    %64 = vector.extract_strided_slice %51 {offsets = [0, 128], sizes = [2, 32], strides = [1, 1]} : vector<2x256xf32> to vector<2x32xf32>
    %65 = vector.extract_strided_slice %52 {offsets = [0, 192], sizes = [2, 32], strides = [1, 1]} : vector<2x256xf32> to vector<2x32xf32>
    %66 = arith.mulf %64, %65 : vector<2x32xf32>
    %67 = arith.addf %63, %66 : vector<2x32xf32>
    %68 = vector.extract_strided_slice %51 {offsets = [0, 224], sizes = [2, 32], strides = [1, 1]} : vector<2x256xf32> to vector<2x32xf32>
    %69 = math.tanh %67 : vector<2x32xf32>
    %70 = arith.mulf %68, %69 : vector<2x32xf32>
    %71 = tpu.concatenate %61, %70 in 1 : vector<2x32xf32>, vector<2x32xf32> -> vector<2x64xf32>
    %72 = vector.extract_strided_slice %5 {offsets = [4, 0], sizes = [2, 128], strides = [1, 1]} : vector<16x256xf32> to vector<2x128xf32>
    %73 = vector.extract_strided_slice %5 {offsets = [10, 128], sizes = [2, 128], strides = [1, 1]} : vector<16x256xf32> to vector<2x128xf32>
    %74 = tpu.concatenate %72, %73 in 1 : vector<2x128xf32>, vector<2x128xf32> -> vector<2x256xf32>
    %75 = arith.truncf %71 : vector<2x64xf32> to vector<2x64xbf16>
    %cst_14 = arith.constant dense<0.000000e+00> : vector<2x256xf32>
    %76 = tpu.matmul %75, %6, %cst_14 {dimension_numbers = #tpu.dot_dimension_numbers<[1], [0], [0], [1], [0, 0, 1, 1], [], []>} : vector<2x64xbf16>, vector<64x256xbf16>, vector<2x256xf32> -> vector<2x256xf32>
    %77 = arith.addf %74, %76 : vector<2x256xf32>
    %78 = arith.negf %77 : vector<2x256xf32>
    %79 = math.exp %78 : vector<2x256xf32>
    %cst_15 = arith.constant 1.000000e+00 : f32
    %80 = vector.broadcast %cst_15 : f32 to vector<2x256xf32>
    %81 = arith.addf %80, %79 : vector<2x256xf32>
    %82 = arith.divf %80, %81 : vector<2x256xf32>
    %83 = math.tanh %77 : vector<2x256xf32>
    %84 = vector.extract_strided_slice %82 {offsets = [0, 32], sizes = [2, 32], strides = [1, 1]} : vector<2x256xf32> to vector<2x32xf32>
    %85 = arith.mulf %84, %58 : vector<2x32xf32>
    %86 = vector.extract_strided_slice %82 {offsets = [0, 0], sizes = [2, 32], strides = [1, 1]} : vector<2x256xf32> to vector<2x32xf32>
    %87 = vector.extract_strided_slice %83 {offsets = [0, 64], sizes = [2, 32], strides = [1, 1]} : vector<2x256xf32> to vector<2x32xf32>
    %88 = arith.mulf %86, %87 : vector<2x32xf32>
    %89 = arith.addf %85, %88 : vector<2x32xf32>
    %90 = vector.extract_strided_slice %82 {offsets = [0, 96], sizes = [2, 32], strides = [1, 1]} : vector<2x256xf32> to vector<2x32xf32>
    %91 = math.tanh %89 : vector<2x32xf32>
    %92 = arith.mulf %90, %91 : vector<2x32xf32>
    %93 = vector.extract_strided_slice %82 {offsets = [0, 160], sizes = [2, 32], strides = [1, 1]} : vector<2x256xf32> to vector<2x32xf32>
    %94 = arith.mulf %93, %67 : vector<2x32xf32>
    %95 = vector.extract_strided_slice %82 {offsets = [0, 128], sizes = [2, 32], strides = [1, 1]} : vector<2x256xf32> to vector<2x32xf32>
    %96 = vector.extract_strided_slice %83 {offsets = [0, 192], sizes = [2, 32], strides = [1, 1]} : vector<2x256xf32> to vector<2x32xf32>
    %97 = arith.mulf %95, %96 : vector<2x32xf32>
    %98 = arith.addf %94, %97 : vector<2x32xf32>
    %99 = vector.extract_strided_slice %82 {offsets = [0, 224], sizes = [2, 32], strides = [1, 1]} : vector<2x256xf32> to vector<2x32xf32>
    %100 = math.tanh %98 : vector<2x32xf32>
    %101 = arith.mulf %99, %100 : vector<2x32xf32>
    %102 = tpu.concatenate %92, %101 in 1 : vector<2x32xf32>, vector<2x32xf32> -> vector<2x64xf32>
    %103 = vector.extract_strided_slice %5 {offsets = [6, 0], sizes = [2, 128], strides = [1, 1]} : vector<16x256xf32> to vector<2x128xf32>
    %104 = vector.extract_strided_slice %5 {offsets = [8, 128], sizes = [2, 128], strides = [1, 1]} : vector<16x256xf32> to vector<2x128xf32>
    %105 = tpu.concatenate %103, %104 in 1 : vector<2x128xf32>, vector<2x128xf32> -> vector<2x256xf32>
    %106 = arith.truncf %102 : vector<2x64xf32> to vector<2x64xbf16>
    %cst_16 = arith.constant dense<0.000000e+00> : vector<2x256xf32>
    %107 = tpu.matmul %106, %6, %cst_16 {dimension_numbers = #tpu.dot_dimension_numbers<[1], [0], [0], [1], [0, 0, 1, 1], [], []>} : vector<2x64xbf16>, vector<64x256xbf16>, vector<2x256xf32> -> vector<2x256xf32>
    %108 = arith.addf %105, %107 : vector<2x256xf32>
    %109 = arith.negf %108 : vector<2x256xf32>
    %110 = math.exp %109 : vector<2x256xf32>
    %cst_17 = arith.constant 1.000000e+00 : f32
    %111 = vector.broadcast %cst_17 : f32 to vector<2x256xf32>
    %112 = arith.addf %111, %110 : vector<2x256xf32>
    %113 = arith.divf %111, %112 : vector<2x256xf32>
    %114 = math.tanh %108 : vector<2x256xf32>
    %115 = vector.extract_strided_slice %113 {offsets = [0, 32], sizes = [2, 32], strides = [1, 1]} : vector<2x256xf32> to vector<2x32xf32>
    %116 = arith.mulf %115, %89 : vector<2x32xf32>
    %117 = vector.extract_strided_slice %113 {offsets = [0, 0], sizes = [2, 32], strides = [1, 1]} : vector<2x256xf32> to vector<2x32xf32>
    %118 = vector.extract_strided_slice %114 {offsets = [0, 64], sizes = [2, 32], strides = [1, 1]} : vector<2x256xf32> to vector<2x32xf32>
    %119 = arith.mulf %117, %118 : vector<2x32xf32>
    %120 = arith.addf %116, %119 : vector<2x32xf32>
    %121 = vector.extract_strided_slice %113 {offsets = [0, 96], sizes = [2, 32], strides = [1, 1]} : vector<2x256xf32> to vector<2x32xf32>
    %122 = math.tanh %120 : vector<2x32xf32>
    %123 = arith.mulf %121, %122 : vector<2x32xf32>
    %124 = vector.extract_strided_slice %113 {offsets = [0, 160], sizes = [2, 32], strides = [1, 1]} : vector<2x256xf32> to vector<2x32xf32>
    %125 = arith.mulf %124, %98 : vector<2x32xf32>
    %126 = vector.extract_strided_slice %113 {offsets = [0, 128], sizes = [2, 32], strides = [1, 1]} : vector<2x256xf32> to vector<2x32xf32>
    %127 = vector.extract_strided_slice %114 {offsets = [0, 192], sizes = [2, 32], strides = [1, 1]} : vector<2x256xf32> to vector<2x32xf32>
    %128 = arith.mulf %126, %127 : vector<2x32xf32>
    %129 = arith.addf %125, %128 : vector<2x32xf32>
    %130 = vector.extract_strided_slice %113 {offsets = [0, 224], sizes = [2, 32], strides = [1, 1]} : vector<2x256xf32> to vector<2x32xf32>
    %131 = math.tanh %129 : vector<2x32xf32>
    %132 = arith.mulf %130, %131 : vector<2x32xf32>
    %133 = tpu.concatenate %123, %132 in 1 : vector<2x32xf32>, vector<2x32xf32> -> vector<2x64xf32>
    %134 = vector.extract_strided_slice %5 {offsets = [8, 0], sizes = [2, 128], strides = [1, 1]} : vector<16x256xf32> to vector<2x128xf32>
    %135 = vector.extract_strided_slice %5 {offsets = [6, 128], sizes = [2, 128], strides = [1, 1]} : vector<16x256xf32> to vector<2x128xf32>
    %136 = tpu.concatenate %134, %135 in 1 : vector<2x128xf32>, vector<2x128xf32> -> vector<2x256xf32>
    %137 = arith.truncf %133 : vector<2x64xf32> to vector<2x64xbf16>
    %cst_18 = arith.constant dense<0.000000e+00> : vector<2x256xf32>
    %138 = tpu.matmul %137, %6, %cst_18 {dimension_numbers = #tpu.dot_dimension_numbers<[1], [0], [0], [1], [0, 0, 1, 1], [], []>} : vector<2x64xbf16>, vector<64x256xbf16>, vector<2x256xf32> -> vector<2x256xf32>
    %139 = arith.addf %136, %138 : vector<2x256xf32>
    %140 = arith.negf %139 : vector<2x256xf32>
    %141 = math.exp %140 : vector<2x256xf32>
    %cst_19 = arith.constant 1.000000e+00 : f32
    %142 = vector.broadcast %cst_19 : f32 to vector<2x256xf32>
    %143 = arith.addf %142, %141 : vector<2x256xf32>
    %144 = arith.divf %142, %143 : vector<2x256xf32>
    %145 = math.tanh %139 : vector<2x256xf32>
    %146 = vector.extract_strided_slice %144 {offsets = [0, 32], sizes = [2, 32], strides = [1, 1]} : vector<2x256xf32> to vector<2x32xf32>
    %147 = arith.mulf %146, %120 : vector<2x32xf32>
    %148 = vector.extract_strided_slice %144 {offsets = [0, 0], sizes = [2, 32], strides = [1, 1]} : vector<2x256xf32> to vector<2x32xf32>
    %149 = vector.extract_strided_slice %145 {offsets = [0, 64], sizes = [2, 32], strides = [1, 1]} : vector<2x256xf32> to vector<2x32xf32>
    %150 = arith.mulf %148, %149 : vector<2x32xf32>
    %151 = arith.addf %147, %150 : vector<2x32xf32>
    %152 = vector.extract_strided_slice %144 {offsets = [0, 96], sizes = [2, 32], strides = [1, 1]} : vector<2x256xf32> to vector<2x32xf32>
    %153 = math.tanh %151 : vector<2x32xf32>
    %154 = arith.mulf %152, %153 : vector<2x32xf32>
    %155 = vector.extract_strided_slice %144 {offsets = [0, 160], sizes = [2, 32], strides = [1, 1]} : vector<2x256xf32> to vector<2x32xf32>
    %156 = arith.mulf %155, %129 : vector<2x32xf32>
    %157 = vector.extract_strided_slice %144 {offsets = [0, 128], sizes = [2, 32], strides = [1, 1]} : vector<2x256xf32> to vector<2x32xf32>
    %158 = vector.extract_strided_slice %145 {offsets = [0, 192], sizes = [2, 32], strides = [1, 1]} : vector<2x256xf32> to vector<2x32xf32>
    %159 = arith.mulf %157, %158 : vector<2x32xf32>
    %160 = arith.addf %156, %159 : vector<2x32xf32>
    %161 = vector.extract_strided_slice %144 {offsets = [0, 224], sizes = [2, 32], strides = [1, 1]} : vector<2x256xf32> to vector<2x32xf32>
    %162 = math.tanh %160 : vector<2x32xf32>
    %163 = arith.mulf %161, %162 : vector<2x32xf32>
    %164 = tpu.concatenate %154, %163 in 1 : vector<2x32xf32>, vector<2x32xf32> -> vector<2x64xf32>
    %165 = vector.extract_strided_slice %5 {offsets = [10, 0], sizes = [2, 128], strides = [1, 1]} : vector<16x256xf32> to vector<2x128xf32>
    %166 = vector.extract_strided_slice %5 {offsets = [4, 128], sizes = [2, 128], strides = [1, 1]} : vector<16x256xf32> to vector<2x128xf32>
    %167 = tpu.concatenate %165, %166 in 1 : vector<2x128xf32>, vector<2x128xf32> -> vector<2x256xf32>
    %168 = arith.truncf %164 : vector<2x64xf32> to vector<2x64xbf16>
    %cst_20 = arith.constant dense<0.000000e+00> : vector<2x256xf32>
    %169 = tpu.matmul %168, %6, %cst_20 {dimension_numbers = #tpu.dot_dimension_numbers<[1], [0], [0], [1], [0, 0, 1, 1], [], []>} : vector<2x64xbf16>, vector<64x256xbf16>, vector<2x256xf32> -> vector<2x256xf32>
    %170 = arith.addf %167, %169 : vector<2x256xf32>
    %171 = arith.negf %170 : vector<2x256xf32>
    %172 = math.exp %171 : vector<2x256xf32>
    %cst_21 = arith.constant 1.000000e+00 : f32
    %173 = vector.broadcast %cst_21 : f32 to vector<2x256xf32>
    %174 = arith.addf %173, %172 : vector<2x256xf32>
    %175 = arith.divf %173, %174 : vector<2x256xf32>
    %176 = math.tanh %170 : vector<2x256xf32>
    %177 = vector.extract_strided_slice %175 {offsets = [0, 32], sizes = [2, 32], strides = [1, 1]} : vector<2x256xf32> to vector<2x32xf32>
    %178 = arith.mulf %177, %151 : vector<2x32xf32>
    %179 = vector.extract_strided_slice %175 {offsets = [0, 0], sizes = [2, 32], strides = [1, 1]} : vector<2x256xf32> to vector<2x32xf32>
    %180 = vector.extract_strided_slice %176 {offsets = [0, 64], sizes = [2, 32], strides = [1, 1]} : vector<2x256xf32> to vector<2x32xf32>
    %181 = arith.mulf %179, %180 : vector<2x32xf32>
    %182 = arith.addf %178, %181 : vector<2x32xf32>
    %183 = vector.extract_strided_slice %175 {offsets = [0, 96], sizes = [2, 32], strides = [1, 1]} : vector<2x256xf32> to vector<2x32xf32>
    %184 = math.tanh %182 : vector<2x32xf32>
    %185 = arith.mulf %183, %184 : vector<2x32xf32>
    %186 = vector.extract_strided_slice %175 {offsets = [0, 160], sizes = [2, 32], strides = [1, 1]} : vector<2x256xf32> to vector<2x32xf32>
    %187 = arith.mulf %186, %160 : vector<2x32xf32>
    %188 = vector.extract_strided_slice %175 {offsets = [0, 128], sizes = [2, 32], strides = [1, 1]} : vector<2x256xf32> to vector<2x32xf32>
    %189 = vector.extract_strided_slice %176 {offsets = [0, 192], sizes = [2, 32], strides = [1, 1]} : vector<2x256xf32> to vector<2x32xf32>
    %190 = arith.mulf %188, %189 : vector<2x32xf32>
    %191 = arith.addf %187, %190 : vector<2x32xf32>
    %192 = vector.extract_strided_slice %175 {offsets = [0, 224], sizes = [2, 32], strides = [1, 1]} : vector<2x256xf32> to vector<2x32xf32>
    %193 = math.tanh %191 : vector<2x32xf32>
    %194 = arith.mulf %192, %193 : vector<2x32xf32>
    %195 = tpu.concatenate %185, %194 in 1 : vector<2x32xf32>, vector<2x32xf32> -> vector<2x64xf32>
    %196 = vector.extract_strided_slice %5 {offsets = [12, 0], sizes = [2, 128], strides = [1, 1]} : vector<16x256xf32> to vector<2x128xf32>
    %197 = vector.extract_strided_slice %5 {offsets = [2, 128], sizes = [2, 128], strides = [1, 1]} : vector<16x256xf32> to vector<2x128xf32>
    %198 = tpu.concatenate %196, %197 in 1 : vector<2x128xf32>, vector<2x128xf32> -> vector<2x256xf32>
    %199 = arith.truncf %195 : vector<2x64xf32> to vector<2x64xbf16>
    %cst_22 = arith.constant dense<0.000000e+00> : vector<2x256xf32>
    %200 = tpu.matmul %199, %6, %cst_22 {dimension_numbers = #tpu.dot_dimension_numbers<[1], [0], [0], [1], [0, 0, 1, 1], [], []>} : vector<2x64xbf16>, vector<64x256xbf16>, vector<2x256xf32> -> vector<2x256xf32>
    %201 = arith.addf %198, %200 : vector<2x256xf32>
    %202 = arith.negf %201 : vector<2x256xf32>
    %203 = math.exp %202 : vector<2x256xf32>
    %cst_23 = arith.constant 1.000000e+00 : f32
    %204 = vector.broadcast %cst_23 : f32 to vector<2x256xf32>
    %205 = arith.addf %204, %203 : vector<2x256xf32>
    %206 = arith.divf %204, %205 : vector<2x256xf32>
    %207 = math.tanh %201 : vector<2x256xf32>
    %208 = vector.extract_strided_slice %206 {offsets = [0, 32], sizes = [2, 32], strides = [1, 1]} : vector<2x256xf32> to vector<2x32xf32>
    %209 = arith.mulf %208, %182 : vector<2x32xf32>
    %210 = vector.extract_strided_slice %206 {offsets = [0, 0], sizes = [2, 32], strides = [1, 1]} : vector<2x256xf32> to vector<2x32xf32>
    %211 = vector.extract_strided_slice %207 {offsets = [0, 64], sizes = [2, 32], strides = [1, 1]} : vector<2x256xf32> to vector<2x32xf32>
    %212 = arith.mulf %210, %211 : vector<2x32xf32>
    %213 = arith.addf %209, %212 : vector<2x32xf32>
    %214 = vector.extract_strided_slice %206 {offsets = [0, 96], sizes = [2, 32], strides = [1, 1]} : vector<2x256xf32> to vector<2x32xf32>
    %215 = math.tanh %213 : vector<2x32xf32>
    %216 = arith.mulf %214, %215 : vector<2x32xf32>
    %217 = vector.extract_strided_slice %206 {offsets = [0, 160], sizes = [2, 32], strides = [1, 1]} : vector<2x256xf32> to vector<2x32xf32>
    %218 = arith.mulf %217, %191 : vector<2x32xf32>
    %219 = vector.extract_strided_slice %206 {offsets = [0, 128], sizes = [2, 32], strides = [1, 1]} : vector<2x256xf32> to vector<2x32xf32>
    %220 = vector.extract_strided_slice %207 {offsets = [0, 192], sizes = [2, 32], strides = [1, 1]} : vector<2x256xf32> to vector<2x32xf32>
    %221 = arith.mulf %219, %220 : vector<2x32xf32>
    %222 = arith.addf %218, %221 : vector<2x32xf32>
    %223 = vector.extract_strided_slice %206 {offsets = [0, 224], sizes = [2, 32], strides = [1, 1]} : vector<2x256xf32> to vector<2x32xf32>
    %224 = math.tanh %222 : vector<2x32xf32>
    %225 = arith.mulf %223, %224 : vector<2x32xf32>
    %226 = tpu.concatenate %216, %225 in 1 : vector<2x32xf32>, vector<2x32xf32> -> vector<2x64xf32>
    %227 = vector.extract_strided_slice %5 {offsets = [14, 0], sizes = [2, 128], strides = [1, 1]} : vector<16x256xf32> to vector<2x128xf32>
    %228 = vector.extract_strided_slice %5 {offsets = [0, 128], sizes = [2, 128], strides = [1, 1]} : vector<16x256xf32> to vector<2x128xf32>
    %229 = tpu.concatenate %227, %228 in 1 : vector<2x128xf32>, vector<2x128xf32> -> vector<2x256xf32>
    %230 = arith.truncf %226 : vector<2x64xf32> to vector<2x64xbf16>
    %cst_24 = arith.constant dense<0.000000e+00> : vector<2x256xf32>
    %231 = tpu.matmul %230, %6, %cst_24 {dimension_numbers = #tpu.dot_dimension_numbers<[1], [0], [0], [1], [0, 0, 1, 1], [], []>} : vector<2x64xbf16>, vector<64x256xbf16>, vector<2x256xf32> -> vector<2x256xf32>
    %232 = arith.addf %229, %231 : vector<2x256xf32>
    %233 = arith.negf %232 : vector<2x256xf32>
    %234 = math.exp %233 : vector<2x256xf32>
    %cst_25 = arith.constant 1.000000e+00 : f32
    %235 = vector.broadcast %cst_25 : f32 to vector<2x256xf32>
    %236 = arith.addf %235, %234 : vector<2x256xf32>
    %237 = arith.divf %235, %236 : vector<2x256xf32>
    %238 = math.tanh %232 : vector<2x256xf32>
    %239 = vector.extract_strided_slice %237 {offsets = [0, 32], sizes = [2, 32], strides = [1, 1]} : vector<2x256xf32> to vector<2x32xf32>
    %240 = arith.mulf %239, %213 : vector<2x32xf32>
    %241 = vector.extract_strided_slice %237 {offsets = [0, 0], sizes = [2, 32], strides = [1, 1]} : vector<2x256xf32> to vector<2x32xf32>
    %242 = vector.extract_strided_slice %238 {offsets = [0, 64], sizes = [2, 32], strides = [1, 1]} : vector<2x256xf32> to vector<2x32xf32>
    %243 = arith.mulf %241, %242 : vector<2x32xf32>
    %244 = arith.addf %240, %243 : vector<2x32xf32>
    %245 = vector.extract_strided_slice %237 {offsets = [0, 96], sizes = [2, 32], strides = [1, 1]} : vector<2x256xf32> to vector<2x32xf32>
    %246 = math.tanh %244 : vector<2x32xf32>
    %247 = arith.mulf %245, %246 : vector<2x32xf32>
    %248 = vector.extract_strided_slice %237 {offsets = [0, 160], sizes = [2, 32], strides = [1, 1]} : vector<2x256xf32> to vector<2x32xf32>
    %249 = arith.mulf %248, %222 : vector<2x32xf32>
    %250 = vector.extract_strided_slice %237 {offsets = [0, 128], sizes = [2, 32], strides = [1, 1]} : vector<2x256xf32> to vector<2x32xf32>
    %251 = vector.extract_strided_slice %238 {offsets = [0, 192], sizes = [2, 32], strides = [1, 1]} : vector<2x256xf32> to vector<2x32xf32>
    %252 = arith.mulf %250, %251 : vector<2x32xf32>
    %253 = arith.addf %249, %252 : vector<2x32xf32>
    %254 = vector.extract_strided_slice %237 {offsets = [0, 224], sizes = [2, 32], strides = [1, 1]} : vector<2x256xf32> to vector<2x32xf32>
    %255 = math.tanh %253 : vector<2x32xf32>
    %256 = arith.mulf %254, %255 : vector<2x32xf32>
    %257 = tpu.concatenate %30, %256 in 1 : vector<2x32xf32>, vector<2x32xf32> -> vector<2x64xf32>
    %258 = tpu.concatenate %61, %225 in 1 : vector<2x32xf32>, vector<2x32xf32> -> vector<2x64xf32>
    %259 = tpu.concatenate %92, %194 in 1 : vector<2x32xf32>, vector<2x32xf32> -> vector<2x64xf32>
    %260 = tpu.concatenate %123, %163 in 1 : vector<2x32xf32>, vector<2x32xf32> -> vector<2x64xf32>
    %261 = tpu.concatenate %154, %132 in 1 : vector<2x32xf32>, vector<2x32xf32> -> vector<2x64xf32>
    %262 = tpu.concatenate %185, %101 in 1 : vector<2x32xf32>, vector<2x32xf32> -> vector<2x64xf32>
    %263 = tpu.concatenate %216, %70 in 1 : vector<2x32xf32>, vector<2x32xf32> -> vector<2x64xf32>
    %264 = tpu.concatenate %247, %39 in 1 : vector<2x32xf32>, vector<2x32xf32> -> vector<2x64xf32>
    %265 = tpu.concatenate %257, %258, %259, %260, %261, %262, %263, %264 in 0 : vector<2x64xf32>, vector<2x64xf32>, vector<2x64xf32>, vector<2x64xf32>, vector<2x64xf32>, vector<2x64xf32>, vector<2x64xf32>, vector<2x64xf32> -> vector<16x64xf32>
    %266 = arith.truncf %265 : vector<16x64xf32> to vector<16x64xbf16>
    %c0_26 = arith.constant 0 : index
    %c0_27 = arith.constant 0 : index
    %267 = vector.load %arg4[%c0_26, %c0_27] : memref<64x128xbf16, #tpu.memory_space<vmem>>, vector<64x128xbf16>
    %cst_28 = arith.constant dense<0.000000e+00> : vector<16x128xf32>
    %268 = tpu.matmul %266, %267, %cst_28 {dimension_numbers = #tpu.dot_dimension_numbers<[1], [0], [0], [1], [0, 0, 1, 1], [], []>} : vector<16x64xbf16>, vector<64x128xbf16>, vector<16x128xf32> -> vector<16x128xf32>
    %c0_29 = arith.constant 0 : index
    %c0_30 = arith.constant 0 : index
    %269 = vector.load %arg6[%c0_29, %c0_30] : memref<1x128xf32, #tpu.memory_space<vmem>>, vector<1x128xf32>
    %270 = vector.broadcast %269 : vector<1x128xf32> to vector<16x128xf32>
    %271 = arith.addf %268, %270 : vector<16x128xf32>
    %c0_31 = arith.constant 0 : index
    %c0_32 = arith.constant 0 : index
    %272 = vector.load %arg5[%c0_31, %c0_32] : memref<32x128xbf16, #tpu.memory_space<vmem>>, vector<32x128xbf16>
    %cst_33 = arith.constant 0.000000e+00 : f32
    %273 = vector.broadcast %cst_33 : f32 to vector<2x32xf32>
    %cst_34 = arith.constant 0.000000e+00 : f32
    %274 = vector.broadcast %cst_34 : f32 to vector<2x32xf32>
    %275 = vector.extract_strided_slice %271 {offsets = [0, 0], sizes = [2, 128], strides = [1, 1]} : vector<16x128xf32> to vector<2x128xf32>
    %276 = arith.truncf %273 : vector<2x32xf32> to vector<2x32xbf16>
    %cst_35 = arith.constant dense<0.000000e+00> : vector<2x128xf32>
    %277 = tpu.matmul %276, %272, %cst_35 {dimension_numbers = #tpu.dot_dimension_numbers<[1], [0], [0], [1], [0, 0, 1, 1], [], []>} : vector<2x32xbf16>, vector<32x128xbf16>, vector<2x128xf32> -> vector<2x128xf32>
    %278 = arith.addf %275, %277 : vector<2x128xf32>
    %279 = arith.negf %278 : vector<2x128xf32>
    %280 = math.exp %279 : vector<2x128xf32>
    %cst_36 = arith.constant 1.000000e+00 : f32
    %281 = vector.broadcast %cst_36 : f32 to vector<2x128xf32>
    %282 = arith.addf %281, %280 : vector<2x128xf32>
    %283 = arith.divf %281, %282 : vector<2x128xf32>
    %284 = math.tanh %278 : vector<2x128xf32>
    %285 = vector.extract_strided_slice %283 {offsets = [0, 32], sizes = [2, 32], strides = [1, 1]} : vector<2x128xf32> to vector<2x32xf32>
    %286 = arith.mulf %285, %274 : vector<2x32xf32>
    %287 = vector.extract_strided_slice %283 {offsets = [0, 0], sizes = [2, 32], strides = [1, 1]} : vector<2x128xf32> to vector<2x32xf32>
    %288 = vector.extract_strided_slice %284 {offsets = [0, 64], sizes = [2, 32], strides = [1, 1]} : vector<2x128xf32> to vector<2x32xf32>
    %289 = arith.mulf %287, %288 : vector<2x32xf32>
    %290 = arith.addf %286, %289 : vector<2x32xf32>
    %291 = vector.extract_strided_slice %283 {offsets = [0, 96], sizes = [2, 32], strides = [1, 1]} : vector<2x128xf32> to vector<2x32xf32>
    %292 = math.tanh %290 : vector<2x32xf32>
    %293 = arith.mulf %291, %292 : vector<2x32xf32>
    %294 = vector.extract_strided_slice %271 {offsets = [2, 0], sizes = [2, 128], strides = [1, 1]} : vector<16x128xf32> to vector<2x128xf32>
    %295 = arith.truncf %293 : vector<2x32xf32> to vector<2x32xbf16>
    %cst_37 = arith.constant dense<0.000000e+00> : vector<2x128xf32>
    %296 = tpu.matmul %295, %272, %cst_37 {dimension_numbers = #tpu.dot_dimension_numbers<[1], [0], [0], [1], [0, 0, 1, 1], [], []>} : vector<2x32xbf16>, vector<32x128xbf16>, vector<2x128xf32> -> vector<2x128xf32>
    %297 = arith.addf %294, %296 : vector<2x128xf32>
    %298 = arith.negf %297 : vector<2x128xf32>
    %299 = math.exp %298 : vector<2x128xf32>
    %cst_38 = arith.constant 1.000000e+00 : f32
    %300 = vector.broadcast %cst_38 : f32 to vector<2x128xf32>
    %301 = arith.addf %300, %299 : vector<2x128xf32>
    %302 = arith.divf %300, %301 : vector<2x128xf32>
    %303 = math.tanh %297 : vector<2x128xf32>
    %304 = vector.extract_strided_slice %302 {offsets = [0, 32], sizes = [2, 32], strides = [1, 1]} : vector<2x128xf32> to vector<2x32xf32>
    %305 = arith.mulf %304, %290 : vector<2x32xf32>
    %306 = vector.extract_strided_slice %302 {offsets = [0, 0], sizes = [2, 32], strides = [1, 1]} : vector<2x128xf32> to vector<2x32xf32>
    %307 = vector.extract_strided_slice %303 {offsets = [0, 64], sizes = [2, 32], strides = [1, 1]} : vector<2x128xf32> to vector<2x32xf32>
    %308 = arith.mulf %306, %307 : vector<2x32xf32>
    %309 = arith.addf %305, %308 : vector<2x32xf32>
    %310 = vector.extract_strided_slice %302 {offsets = [0, 96], sizes = [2, 32], strides = [1, 1]} : vector<2x128xf32> to vector<2x32xf32>
    %311 = math.tanh %309 : vector<2x32xf32>
    %312 = arith.mulf %310, %311 : vector<2x32xf32>
    %313 = vector.extract_strided_slice %271 {offsets = [4, 0], sizes = [2, 128], strides = [1, 1]} : vector<16x128xf32> to vector<2x128xf32>
    %314 = arith.truncf %312 : vector<2x32xf32> to vector<2x32xbf16>
    %cst_39 = arith.constant dense<0.000000e+00> : vector<2x128xf32>
    %315 = tpu.matmul %314, %272, %cst_39 {dimension_numbers = #tpu.dot_dimension_numbers<[1], [0], [0], [1], [0, 0, 1, 1], [], []>} : vector<2x32xbf16>, vector<32x128xbf16>, vector<2x128xf32> -> vector<2x128xf32>
    %316 = arith.addf %313, %315 : vector<2x128xf32>
    %317 = arith.negf %316 : vector<2x128xf32>
    %318 = math.exp %317 : vector<2x128xf32>
    %cst_40 = arith.constant 1.000000e+00 : f32
    %319 = vector.broadcast %cst_40 : f32 to vector<2x128xf32>
    %320 = arith.addf %319, %318 : vector<2x128xf32>
    %321 = arith.divf %319, %320 : vector<2x128xf32>
    %322 = math.tanh %316 : vector<2x128xf32>
    %323 = vector.extract_strided_slice %321 {offsets = [0, 32], sizes = [2, 32], strides = [1, 1]} : vector<2x128xf32> to vector<2x32xf32>
    %324 = arith.mulf %323, %309 : vector<2x32xf32>
    %325 = vector.extract_strided_slice %321 {offsets = [0, 0], sizes = [2, 32], strides = [1, 1]} : vector<2x128xf32> to vector<2x32xf32>
    %326 = vector.extract_strided_slice %322 {offsets = [0, 64], sizes = [2, 32], strides = [1, 1]} : vector<2x128xf32> to vector<2x32xf32>
    %327 = arith.mulf %325, %326 : vector<2x32xf32>
    %328 = arith.addf %324, %327 : vector<2x32xf32>
    %329 = vector.extract_strided_slice %321 {offsets = [0, 96], sizes = [2, 32], strides = [1, 1]} : vector<2x128xf32> to vector<2x32xf32>
    %330 = math.tanh %328 : vector<2x32xf32>
    %331 = arith.mulf %329, %330 : vector<2x32xf32>
    %332 = vector.extract_strided_slice %271 {offsets = [6, 0], sizes = [2, 128], strides = [1, 1]} : vector<16x128xf32> to vector<2x128xf32>
    %333 = arith.truncf %331 : vector<2x32xf32> to vector<2x32xbf16>
    %cst_41 = arith.constant dense<0.000000e+00> : vector<2x128xf32>
    %334 = tpu.matmul %333, %272, %cst_41 {dimension_numbers = #tpu.dot_dimension_numbers<[1], [0], [0], [1], [0, 0, 1, 1], [], []>} : vector<2x32xbf16>, vector<32x128xbf16>, vector<2x128xf32> -> vector<2x128xf32>
    %335 = arith.addf %332, %334 : vector<2x128xf32>
    %336 = arith.negf %335 : vector<2x128xf32>
    %337 = math.exp %336 : vector<2x128xf32>
    %cst_42 = arith.constant 1.000000e+00 : f32
    %338 = vector.broadcast %cst_42 : f32 to vector<2x128xf32>
    %339 = arith.addf %338, %337 : vector<2x128xf32>
    %340 = arith.divf %338, %339 : vector<2x128xf32>
    %341 = math.tanh %335 : vector<2x128xf32>
    %342 = vector.extract_strided_slice %340 {offsets = [0, 32], sizes = [2, 32], strides = [1, 1]} : vector<2x128xf32> to vector<2x32xf32>
    %343 = arith.mulf %342, %328 : vector<2x32xf32>
    %344 = vector.extract_strided_slice %340 {offsets = [0, 0], sizes = [2, 32], strides = [1, 1]} : vector<2x128xf32> to vector<2x32xf32>
    %345 = vector.extract_strided_slice %341 {offsets = [0, 64], sizes = [2, 32], strides = [1, 1]} : vector<2x128xf32> to vector<2x32xf32>
    %346 = arith.mulf %344, %345 : vector<2x32xf32>
    %347 = arith.addf %343, %346 : vector<2x32xf32>
    %348 = vector.extract_strided_slice %340 {offsets = [0, 96], sizes = [2, 32], strides = [1, 1]} : vector<2x128xf32> to vector<2x32xf32>
    %349 = math.tanh %347 : vector<2x32xf32>
    %350 = arith.mulf %348, %349 : vector<2x32xf32>
    %351 = vector.extract_strided_slice %271 {offsets = [8, 0], sizes = [2, 128], strides = [1, 1]} : vector<16x128xf32> to vector<2x128xf32>
    %352 = arith.truncf %350 : vector<2x32xf32> to vector<2x32xbf16>
    %cst_43 = arith.constant dense<0.000000e+00> : vector<2x128xf32>
    %353 = tpu.matmul %352, %272, %cst_43 {dimension_numbers = #tpu.dot_dimension_numbers<[1], [0], [0], [1], [0, 0, 1, 1], [], []>} : vector<2x32xbf16>, vector<32x128xbf16>, vector<2x128xf32> -> vector<2x128xf32>
    %354 = arith.addf %351, %353 : vector<2x128xf32>
    %355 = arith.negf %354 : vector<2x128xf32>
    %356 = math.exp %355 : vector<2x128xf32>
    %cst_44 = arith.constant 1.000000e+00 : f32
    %357 = vector.broadcast %cst_44 : f32 to vector<2x128xf32>
    %358 = arith.addf %357, %356 : vector<2x128xf32>
    %359 = arith.divf %357, %358 : vector<2x128xf32>
    %360 = math.tanh %354 : vector<2x128xf32>
    %361 = vector.extract_strided_slice %359 {offsets = [0, 32], sizes = [2, 32], strides = [1, 1]} : vector<2x128xf32> to vector<2x32xf32>
    %362 = arith.mulf %361, %347 : vector<2x32xf32>
    %363 = vector.extract_strided_slice %359 {offsets = [0, 0], sizes = [2, 32], strides = [1, 1]} : vector<2x128xf32> to vector<2x32xf32>
    %364 = vector.extract_strided_slice %360 {offsets = [0, 64], sizes = [2, 32], strides = [1, 1]} : vector<2x128xf32> to vector<2x32xf32>
    %365 = arith.mulf %363, %364 : vector<2x32xf32>
    %366 = arith.addf %362, %365 : vector<2x32xf32>
    %367 = vector.extract_strided_slice %359 {offsets = [0, 96], sizes = [2, 32], strides = [1, 1]} : vector<2x128xf32> to vector<2x32xf32>
    %368 = math.tanh %366 : vector<2x32xf32>
    %369 = arith.mulf %367, %368 : vector<2x32xf32>
    %370 = vector.extract_strided_slice %271 {offsets = [10, 0], sizes = [2, 128], strides = [1, 1]} : vector<16x128xf32> to vector<2x128xf32>
    %371 = arith.truncf %369 : vector<2x32xf32> to vector<2x32xbf16>
    %cst_45 = arith.constant dense<0.000000e+00> : vector<2x128xf32>
    %372 = tpu.matmul %371, %272, %cst_45 {dimension_numbers = #tpu.dot_dimension_numbers<[1], [0], [0], [1], [0, 0, 1, 1], [], []>} : vector<2x32xbf16>, vector<32x128xbf16>, vector<2x128xf32> -> vector<2x128xf32>
    %373 = arith.addf %370, %372 : vector<2x128xf32>
    %374 = arith.negf %373 : vector<2x128xf32>
    %375 = math.exp %374 : vector<2x128xf32>
    %cst_46 = arith.constant 1.000000e+00 : f32
    %376 = vector.broadcast %cst_46 : f32 to vector<2x128xf32>
    %377 = arith.addf %376, %375 : vector<2x128xf32>
    %378 = arith.divf %376, %377 : vector<2x128xf32>
    %379 = math.tanh %373 : vector<2x128xf32>
    %380 = vector.extract_strided_slice %378 {offsets = [0, 32], sizes = [2, 32], strides = [1, 1]} : vector<2x128xf32> to vector<2x32xf32>
    %381 = arith.mulf %380, %366 : vector<2x32xf32>
    %382 = vector.extract_strided_slice %378 {offsets = [0, 0], sizes = [2, 32], strides = [1, 1]} : vector<2x128xf32> to vector<2x32xf32>
    %383 = vector.extract_strided_slice %379 {offsets = [0, 64], sizes = [2, 32], strides = [1, 1]} : vector<2x128xf32> to vector<2x32xf32>
    %384 = arith.mulf %382, %383 : vector<2x32xf32>
    %385 = arith.addf %381, %384 : vector<2x32xf32>
    %386 = vector.extract_strided_slice %378 {offsets = [0, 96], sizes = [2, 32], strides = [1, 1]} : vector<2x128xf32> to vector<2x32xf32>
    %387 = math.tanh %385 : vector<2x32xf32>
    %388 = arith.mulf %386, %387 : vector<2x32xf32>
    %389 = vector.extract_strided_slice %271 {offsets = [12, 0], sizes = [2, 128], strides = [1, 1]} : vector<16x128xf32> to vector<2x128xf32>
    %390 = arith.truncf %388 : vector<2x32xf32> to vector<2x32xbf16>
    %cst_47 = arith.constant dense<0.000000e+00> : vector<2x128xf32>
    %391 = tpu.matmul %390, %272, %cst_47 {dimension_numbers = #tpu.dot_dimension_numbers<[1], [0], [0], [1], [0, 0, 1, 1], [], []>} : vector<2x32xbf16>, vector<32x128xbf16>, vector<2x128xf32> -> vector<2x128xf32>
    %392 = arith.addf %389, %391 : vector<2x128xf32>
    %393 = arith.negf %392 : vector<2x128xf32>
    %394 = math.exp %393 : vector<2x128xf32>
    %cst_48 = arith.constant 1.000000e+00 : f32
    %395 = vector.broadcast %cst_48 : f32 to vector<2x128xf32>
    %396 = arith.addf %395, %394 : vector<2x128xf32>
    %397 = arith.divf %395, %396 : vector<2x128xf32>
    %398 = math.tanh %392 : vector<2x128xf32>
    %399 = vector.extract_strided_slice %397 {offsets = [0, 32], sizes = [2, 32], strides = [1, 1]} : vector<2x128xf32> to vector<2x32xf32>
    %400 = arith.mulf %399, %385 : vector<2x32xf32>
    %401 = vector.extract_strided_slice %397 {offsets = [0, 0], sizes = [2, 32], strides = [1, 1]} : vector<2x128xf32> to vector<2x32xf32>
    %402 = vector.extract_strided_slice %398 {offsets = [0, 64], sizes = [2, 32], strides = [1, 1]} : vector<2x128xf32> to vector<2x32xf32>
    %403 = arith.mulf %401, %402 : vector<2x32xf32>
    %404 = arith.addf %400, %403 : vector<2x32xf32>
    %405 = vector.extract_strided_slice %397 {offsets = [0, 96], sizes = [2, 32], strides = [1, 1]} : vector<2x128xf32> to vector<2x32xf32>
    %406 = math.tanh %404 : vector<2x32xf32>
    %407 = arith.mulf %405, %406 : vector<2x32xf32>
    %408 = vector.extract_strided_slice %271 {offsets = [14, 0], sizes = [2, 128], strides = [1, 1]} : vector<16x128xf32> to vector<2x128xf32>
    %409 = arith.truncf %407 : vector<2x32xf32> to vector<2x32xbf16>
    %cst_49 = arith.constant dense<0.000000e+00> : vector<2x128xf32>
    %410 = tpu.matmul %409, %272, %cst_49 {dimension_numbers = #tpu.dot_dimension_numbers<[1], [0], [0], [1], [0, 0, 1, 1], [], []>} : vector<2x32xbf16>, vector<32x128xbf16>, vector<2x128xf32> -> vector<2x128xf32>
    %411 = arith.addf %408, %410 : vector<2x128xf32>
    %412 = arith.negf %411 : vector<2x128xf32>
    %413 = math.exp %412 : vector<2x128xf32>
    %cst_50 = arith.constant 1.000000e+00 : f32
    %414 = vector.broadcast %cst_50 : f32 to vector<2x128xf32>
    %415 = arith.addf %414, %413 : vector<2x128xf32>
    %416 = arith.divf %414, %415 : vector<2x128xf32>
    %417 = math.tanh %411 : vector<2x128xf32>
    %418 = vector.extract_strided_slice %416 {offsets = [0, 32], sizes = [2, 32], strides = [1, 1]} : vector<2x128xf32> to vector<2x32xf32>
    %419 = arith.mulf %418, %404 : vector<2x32xf32>
    %420 = vector.extract_strided_slice %416 {offsets = [0, 0], sizes = [2, 32], strides = [1, 1]} : vector<2x128xf32> to vector<2x32xf32>
    %421 = vector.extract_strided_slice %417 {offsets = [0, 64], sizes = [2, 32], strides = [1, 1]} : vector<2x128xf32> to vector<2x32xf32>
    %422 = arith.mulf %420, %421 : vector<2x32xf32>
    %423 = arith.addf %419, %422 : vector<2x32xf32>
    %424 = vector.extract_strided_slice %416 {offsets = [0, 96], sizes = [2, 32], strides = [1, 1]} : vector<2x128xf32> to vector<2x32xf32>
    %425 = math.tanh %423 : vector<2x32xf32>
    %426 = arith.mulf %424, %425 : vector<2x32xf32>
    %427 = vector.extract_strided_slice %266 {offsets = [14, 0], sizes = [2, 64], strides = [1, 1]} : vector<16x64xbf16> to vector<2x64xbf16>
    %c0_51 = arith.constant 0 : index
    %c0_52 = arith.constant 0 : index
    %428 = vector.load %arg7[%c0_51, %c0_52] : memref<64x128xbf16, #tpu.memory_space<vmem>>, vector<64x128xbf16>
    %cst_53 = arith.constant dense<0.000000e+00> : vector<2x128xf32>
    %429 = tpu.matmul %427, %428, %cst_53 {dimension_numbers = #tpu.dot_dimension_numbers<[1], [0], [0], [1], [0, 0, 1, 1], [], []>} : vector<2x64xbf16>, vector<64x128xbf16>, vector<2x128xf32> -> vector<2x128xf32>
    %c0_54 = arith.constant 0 : index
    %c0_55 = arith.constant 0 : index
    %430 = vector.load %arg8[%c0_54, %c0_55] : memref<1x128xf32, #tpu.memory_space<vmem>>, vector<1x128xf32>
    %431 = vector.broadcast %430 : vector<1x128xf32> to vector<2x128xf32>
    %432 = arith.addf %429, %431 : vector<2x128xf32>
    %cst_56 = arith.constant 0.000000e+00 : f32
    %433 = vector.broadcast %cst_56 : f32 to vector<2x32xf32>
    %434 = arith.negf %432 : vector<2x128xf32>
    %435 = math.exp %434 : vector<2x128xf32>
    %cst_57 = arith.constant 1.000000e+00 : f32
    %436 = vector.broadcast %cst_57 : f32 to vector<2x128xf32>
    %437 = arith.addf %436, %435 : vector<2x128xf32>
    %438 = arith.divf %436, %437 : vector<2x128xf32>
    %439 = math.tanh %432 : vector<2x128xf32>
    %440 = vector.extract_strided_slice %438 {offsets = [0, 32], sizes = [2, 32], strides = [1, 1]} : vector<2x128xf32> to vector<2x32xf32>
    %441 = arith.mulf %440, %433 : vector<2x32xf32>
    %442 = vector.extract_strided_slice %438 {offsets = [0, 0], sizes = [2, 32], strides = [1, 1]} : vector<2x128xf32> to vector<2x32xf32>
    %443 = vector.extract_strided_slice %439 {offsets = [0, 64], sizes = [2, 32], strides = [1, 1]} : vector<2x128xf32> to vector<2x32xf32>
    %444 = arith.mulf %442, %443 : vector<2x32xf32>
    %445 = arith.addf %441, %444 : vector<2x32xf32>
    %446 = vector.extract_strided_slice %438 {offsets = [0, 96], sizes = [2, 32], strides = [1, 1]} : vector<2x128xf32> to vector<2x32xf32>
    %447 = math.tanh %445 : vector<2x32xf32>
    %448 = arith.mulf %446, %447 : vector<2x32xf32>
    %449 = tpu.concatenate %426, %448 in 1 : vector<2x32xf32>, vector<2x32xf32> -> vector<2x64xf32>
    %c0_58 = arith.constant 0 : index
    %c0_59 = arith.constant 0 : index
    %450 = vector.load %arg9[%c0_58, %c0_59] : memref<64x16xf32, #tpu.memory_space<vmem>>, vector<64x16xf32>
    %cst_60 = arith.constant dense<0.000000e+00> : vector<2x16xf32>
    %451 = tpu.matmul %449, %450, %cst_60 {dimension_numbers = #tpu.dot_dimension_numbers<[1], [0], [0], [1], [0, 0, 1, 1], [], []>} : vector<2x64xf32>, vector<64x16xf32>, vector<2x16xf32> -> vector<2x16xf32>
    %c0_61 = arith.constant 0 : index
    %c0_62 = arith.constant 0 : index
    %452 = vector.load %arg10[%c0_61, %c0_62] : memref<1x16xf32, #tpu.memory_space<vmem>>, vector<1x16xf32>
    %453 = vector.broadcast %452 : vector<1x16xf32> to vector<2x16xf32>
    %454 = arith.addf %451, %453 : vector<2x16xf32>
    %cst_63 = arith.constant 0.000000e+00 : f32
    %455 = vector.broadcast %cst_63 : f32 to vector<2x16xf32>
    %456 = arith.maximumf %454, %455 : vector<2x16xf32>
    %c0_64 = arith.constant 0 : index
    %c0_65 = arith.constant 0 : index
    %457 = vector.load %arg11[%c0_64, %c0_65] : memref<16x1xf32, #tpu.memory_space<vmem>>, vector<16x1xf32>
    %cst_66 = arith.constant dense<0.000000e+00> : vector<2x1xf32>
    %458 = tpu.matmul %456, %457, %cst_66 {dimension_numbers = #tpu.dot_dimension_numbers<[1], [0], [0], [1], [0, 0, 1, 1], [], []>} : vector<2x16xf32>, vector<16x1xf32>, vector<2x1xf32> -> vector<2x1xf32>
    %c0_67 = arith.constant 0 : index
    %c0_68 = arith.constant 0 : index
    %459 = vector.load %arg12[%c0_67, %c0_68] : memref<1x1xf32, #tpu.memory_space<vmem>>, vector<1x1xf32>
    %460 = vector.broadcast %459 : vector<1x1xf32> to vector<2x1xf32>
    %461 = arith.addf %458, %460 : vector<2x1xf32>
    %462 = arith.negf %461 : vector<2x1xf32>
    %463 = math.exp %462 : vector<2x1xf32>
    %cst_69 = arith.constant 1.000000e+00 : f32
    %464 = vector.broadcast %cst_69 : f32 to vector<2x1xf32>
    %465 = arith.addf %464, %463 : vector<2x1xf32>
    %466 = arith.divf %464, %465 : vector<2x1xf32>
    %c0_70 = arith.constant 0 : index
    %c0_71 = arith.constant 0 : index
    %467 = vector.load %arg13[%c0_70, %c0_71] : memref<2x1xf32, #tpu.memory_space<vmem>>, vector<2x1xf32>
    tpu.vector_store %arg13[%c0_70, %c0_71], %466 {strides = array<i32>} : memref<2x1xf32, #tpu.memory_space<vmem>>, vector<2x1xf32>,
    return
  }
}

</mosaic_0001>

<llo_original>
// kernel: tpu_custom_call.1
$region0: #{tpu_custom_call.1}
  #allocation0 [shape = 'u32[]', space=smem, size = 0x4, offset = 0x4, fixed_abs, tag = 'smem constant byte address 0x4 - core index']
  #allocation1 [shape = 'u32[72,128]{1,0:T(1,128)}', space=vmem, size = 0x9000, scoped, tag = 'internal scratch']
  #allocation2 [shape = 'f32[1,1]{1,0:T(1,128)S(1)}', space=vmem, size = 0x200, scoped, tag = 'scoped memory for tpu_custom_call.1']
  %s0 = inlined_call_operand.vmem [shape: bf16[16,16], index: 0, kind: input, shape index: {}]
  %s1 = inlined_call_operand.vmem [shape: bf16[16,256], index: 1, kind: input, shape index: {}]
  %s2 = inlined_call_operand.vmem [shape: bf16[64,256], index: 2, kind: input, shape index: {}]
  %s3 = inlined_call_operand.vmem [shape: f32[1,256], index: 3, kind: input, shape index: {}]
  %s4 = inlined_call_operand.hbm [shape: bf16[64,128], index: 4, kind: input, shape index: {}]
  %s5 = inlined_call_operand.hbm [shape: bf16[32,128], index: 5, kind: input, shape index: {}]
  %s6 = inlined_call_operand.vmem [shape: f32[1,128], index: 6, kind: input, shape index: {}]
  %s7 = inlined_call_operand.hbm [shape: bf16[64,128], index: 7, kind: input, shape index: {}]
  %s8 = inlined_call_operand.hbm [shape: f32[1,128], index: 8, kind: input, shape index: {}]
  %s9 = inlined_call_operand.vmem [shape: f32[64,16], index: 9, kind: input, shape index: {}]
  %s10 = inlined_call_operand.hbm [shape: f32[1,16], index: 10, kind: input, shape index: {}]
  %s11 = inlined_call_operand.vmem [shape: f32[16,1], index: 11, kind: input, shape index: {}]
  %s12 = inlined_call_operand.<no memory space> [shape: f32[1,1], index: 12, kind: input, shape index: {}]
  %s13 = inlined_call_operand.vmem [shape: f32[2,1], index: 13, kind: output, shape index: {}]
  %s14 = sld [smem:[#allocation0]]
  $region82: #{tpu_custom_call.1} parent=0
    _
  %s16 = ssub.s32 1, %s14
  %s17 = scalar_select 0, %s16, %s14
  %v18 = vstv %s12
  %19 = vst [vmem:[#allocation2] sm:$0x1] %v18
  $region1: #{tpu_custom_call.1} parent=0
    #allocation3 [shape = 'u8[16384]{0}', space=vmem, size = 0x4000, scoped, tag = 'input window, operand 4, single buffered']
    #allocation4 [shape = 's32[1]{0}', space=sflag, size = 0x4, scoped, tag = 'scoped memory for tpu_custom_call.1']
    #allocation5 [shape = 'u8[8192]{0}', space=vmem, size = 0x2000, scoped, tag = 'input window, operand 5, single buffered']
    #allocation6 [shape = 's32[1]{0}', space=sflag, size = 0x4, scoped, tag = 'scoped memory for tpu_custom_call.1']
    #allocation7 [shape = 'u8[16384]{0}', space=vmem, size = 0x4000, scoped, tag = 'input window, operand 7, single buffered']
    #allocation8 [shape = 'u8[512]{0}', space=vmem, size = 0x400, scoped, tag = 'input window, operand 8, single buffered']
    #allocation9 [shape = 's32[1]{0}', space=sflag, size = 0x4, scoped, tag = 'scoped memory for tpu_custom_call.1']
    #allocation10 [shape = 'u8[512]{0}', space=vmem, size = 0x400, scoped, tag = 'input window, operand 10, single buffered']
    %20 = vsyncpa [#allocation4], 0
    %21 = vsyncpa [#allocation6], 0
    %22 = vsyncpa [#allocation9], 0
    // Predicated region
    $region2: #{tpu_custom_call.1} parent=1 // pred_check
      _
    $region3: #{tpu_custom_call.1} parent=1 // pred_check_branch
      %24 = sbr.rel (0) target = $region5
    $region4: #{tpu_custom_call.1} parent=1 // pred_region
      _
    $region5: #{tpu_custom_call.1} parent=1 // pred_fallthru
      _
    // Predicated region
    $region6: #{tpu_custom_call.1} parent=1 // pred_check
      _
    $region7: #{tpu_custom_call.1} parent=1 // pred_check_branch
      %26 = sbr.rel (0) target = $region9
    $region8: #{tpu_custom_call.1} parent=1 // pred_region
      _
    $region9: #{tpu_custom_call.1} parent=1 // pred_fallthru
      _
    // Predicated region
    $region10: #{tpu_custom_call.1} parent=1 // pred_check
      _
    $region11: #{tpu_custom_call.1} parent=1 // pred_check_branch
      %28 = sbr.rel (0) target = $region13
    $region12: #{tpu_custom_call.1} parent=1 // pred_region
      _
    $region13: #{tpu_custom_call.1} parent=1 // pred_fallthru
      _
    // Predicated region
    $region14: #{tpu_custom_call.1} parent=1 // pred_check
      _
    $region15: #{tpu_custom_call.1} parent=1 // pred_check_branch
      %30 = sbr.rel (0) target = $region17
    $region16: #{tpu_custom_call.1} parent=1 // pred_region
      _
    $region17: #{tpu_custom_call.1} parent=1 // pred_fallthru
      _
    // Predicated region
    $region18: #{tpu_custom_call.1} parent=1 // pred_check
      _
    $region19: #{tpu_custom_call.1} parent=1 // pred_check_branch
      %32 = sbr.rel (0) target = $region21
    $region20: #{tpu_custom_call.1} parent=1 // pred_region
      %34 = vsyncadd [#allocation4], 0
      %s35 = sshll.u32 %s4, 4
      %s36 = int_to_ptr.hbm [resolvable:$true] %s35
      %s37 = sshll.u32 [#allocation3], 4
      %s38 = int_to_ptr.vmem [resolvable:$true] %s37
      %43 = dma.hbm_to_vmem [thread:$0]  %s36, 512, %s38, [#allocation4], 64, 64, 4
    $region21: #{tpu_custom_call.1} parent=1 // pred_fallthru
      _
    // Predicated region
    $region22: #{tpu_custom_call.1} parent=1 // pred_check
      _
    $region23: #{tpu_custom_call.1} parent=1 // pred_check_branch
      %45 = sbr.rel (0) target = $region25
    $region24: #{tpu_custom_call.1} parent=1 // pred_region
      %47 = vsyncadd [#allocation6], 0
      %s48 = sshll.u32 %s5, 4
      %s49 = int_to_ptr.hbm [resolvable:$true] %s48
      %s50 = sshll.u32 [#allocation5], 4
      %s51 = int_to_ptr.vmem [resolvable:$true] %s50
      %56 = dma.hbm_to_vmem [thread:$0]  %s49, 256, %s51, [#allocation6], 64, 64, 4
    $region25: #{tpu_custom_call.1} parent=1 // pred_fallthru
      _
    // Predicated region
    $region26: #{tpu_custom_call.1} parent=1 // pred_check
      _
    $region27: #{tpu_custom_call.1} parent=1 // pred_check_branch
      %58 = sbr.rel (0) target = $region29
    $region28: #{tpu_custom_call.1} parent=1 // pred_region
      _
    $region29: #{tpu_custom_call.1} parent=1 // pred_fallthru
      _
    // Predicated region
    $region30: #{tpu_custom_call.1} parent=1 // pred_check
      _
    $region31: #{tpu_custom_call.1} parent=1 // pred_check_branch
      %60 = sbr.rel (0) target = $region33
    $region32: #{tpu_custom_call.1} parent=1 // pred_region
      %62 = vsyncadd [#allocation6], 0
      %s63 = sshll.u32 %s7, 4
      %s64 = int_to_ptr.hbm [resolvable:$true] %s63
      %s65 = sshll.u32 [#allocation7], 4
      %s66 = int_to_ptr.vmem [resolvable:$true] %s65
      %71 = dma.hbm_to_vmem [thread:$0]  %s64, 512, %s66, [#allocation6], 64, 64, 4
    $region33: #{tpu_custom_call.1} parent=1 // pred_fallthru
      _
    // Predicated region
    $region34: #{tpu_custom_call.1} parent=1 // pred_check
      _
    $region35: #{tpu_custom_call.1} parent=1 // pred_check_branch
      %73 = sbr.rel (0) target = $region37
    $region36: #{tpu_custom_call.1} parent=1 // pred_region
      %75 = vsyncadd [#allocation9], 0
      %s77 = sshll.u32 %s8, 4
      %s78 = int_to_ptr.hbm [resolvable:$true] %s77
      %s79 = sshll.u32 [#allocation8], 4
      %s80 = int_to_ptr.vmem [resolvable:$true] %s79
      %82 = dma.hbm_to_vmem [thread:$0]  %s78, 16, %s80, [#allocation9]
    $region37: #{tpu_custom_call.1} parent=1 // pred_fallthru
      _
    // Predicated region
    $region38: #{tpu_custom_call.1} parent=1 // pred_check
      _
    $region39: #{tpu_custom_call.1} parent=1 // pred_check_branch
      %84 = sbr.rel (0) target = $region41
    $region40: #{tpu_custom_call.1} parent=1 // pred_region
      _
    $region41: #{tpu_custom_call.1} parent=1 // pred_fallthru
      _
    // Predicated region
    $region42: #{tpu_custom_call.1} parent=1 // pred_check
      _
    $region43: #{tpu_custom_call.1} parent=1 // pred_check_branch
      %86 = sbr.rel (0) target = $region45
    $region44: #{tpu_custom_call.1} parent=1 // pred_region
      %88 = vsyncadd [#allocation9], 0
      %s90 = sshll.u32 %s10, 4
      %s91 = int_to_ptr.hbm [resolvable:$true] %s90
      %s92 = sshll.u32 [#allocation10], 4
      %s93 = int_to_ptr.vmem [resolvable:$true] %s92
      %95 = dma.hbm_to_vmem [thread:$0]  %s91, 16, %s93, [#allocation9]
    $region45: #{tpu_custom_call.1} parent=1 // pred_fallthru
      _
    // Predicated region
    $region46: #{tpu_custom_call.1} parent=1 // pred_check
      _
    $region47: #{tpu_custom_call.1} parent=1 // pred_check_branch
      %97 = sbr.rel (0) target = $region49
    $region48: #{tpu_custom_call.1} parent=1 // pred_region
      _
    $region49: #{tpu_custom_call.1} parent=1 // pred_fallthru
      _
    // Predicated region
    $region50: #{tpu_custom_call.1} parent=1 // pred_check
      _
    $region51: #{tpu_custom_call.1} parent=1 // pred_check_branch
      %99 = sbr.rel (0) target = $region53
    $region52: #{tpu_custom_call.1} parent=1 // pred_region
      _
    $region53: #{tpu_custom_call.1} parent=1 // pred_fallthru
      _
    // Predicated region
    $region54: #{tpu_custom_call.1} parent=1 // pred_check
      _
    $region55: #{tpu_custom_call.1} parent=1 // pred_check_branch
      %101 = sbr.rel (0) target = $region57
    $region56: #{tpu_custom_call.1} parent=1 // pred_region
      %103 = dma.done [#allocation4], 512
    $region57: #{tpu_custom_call.1} parent=1 // pred_fallthru
      _
    // Predicated region
    $region58: #{tpu_custom_call.1} parent=1 // pred_check
      _
    $region59: #{tpu_custom_call.1} parent=1 // pred_check_branch
      %105 = sbr.rel (0) target = $region61
    $region60: #{tpu_custom_call.1} parent=1 // pred_region
      %107 = dma.done [#allocation6], 256
    $region61: #{tpu_custom_call.1} parent=1 // pred_fallthru
      _
    // Predicated region
    $region62: #{tpu_custom_call.1} parent=1 // pred_check
      _
    $region63: #{tpu_custom_call.1} parent=1 // pred_check_branch
      %109 = sbr.rel (0) target = $region65
    $region64: #{tpu_custom_call.1} parent=1 // pred_region
      %111 = dma.done [#allocation6], 512
    $region65: #{tpu_custom_call.1} parent=1 // pred_fallthru
      _
    // Predicated region
    $region66: #{tpu_custom_call.1} parent=1 // pred_check
      _
    $region67: #{tpu_custom_call.1} parent=1 // pred_check_branch
      %113 = sbr.rel (0) target = $region69
    $region68: #{tpu_custom_call.1} parent=1 // pred_region
      %115 = dma.done [#allocation9], 16
    $region69: #{tpu_custom_call.1} parent=1 // pred_fallthru
      _
    // Predicated region
    $region70: #{tpu_custom_call.1} parent=1 // pred_check
      _
    $region71: #{tpu_custom_call.1} parent=1 // pred_check_branch
      %117 = sbr.rel (0) target = $region73
    $region72: #{tpu_custom_call.1} parent=1 // pred_region
      %119 = dma.done [#allocation9], 16
    $region73: #{tpu_custom_call.1} parent=1 // pred_fallthru
      _
    %v121 = vld [vmem:[%s0] sm:$0xf]
    %v122 = vld [vmem:[%s0 + $0x4] sm:$0xf]
    %v123 = vld [vmem:[%s1] sm:$0xff]
    %v124 = vld [vmem:[%s1 + $0x8] sm:$0xff]
    %v125 = vld [vmem:[%s3] sm:$0x3]
    %v127 = vperm.slane %v125, 0
    %v128 = vperm.slane %v125, 1
    %v133 = vunpack.c.l.b16 %v121
    %v134 = vunpack.c.l.b16 %v122
    %v135 = vpack.c.b16 %v134, %v133
    %v138 = vunpack.c.l.b16 %v123
    %v139 = vunpack.c.h.b16 %v123
    %v140 = vunpack.c.l.b16 %v124
    %v141 = vunpack.c.h.b16 %v124
    %v142 = vpack.c.b16 %v140, %v138
    %v143 = vpack.c.b16 %v141, %v139
    %vm146 = vcmask 130048
    %v148 = vsel %vm146, %v135, 0
    %150 = vmatpush.bf16.msra.mxu0 0
    %151 = vmatpush.bf16.msra.mxu0 0
    %152 = vmatpush.bf16.msra.mxu0 0
    %153 = vmatpush.bf16.msra.mxu0 0
    %154 = vmatpush.bf16.msra.mxu0 0
    %155 = vmatpush.bf16.msra.mxu0 0
    %156 = vmatpush.bf16.msra.mxu0 0
    %157 = vmatpush.bf16.msra.mxu0 %v142
    %158 = vmatmul.bf16.gmra.mxu0 %v148
    %v159 = vpop.f32.mrf.mxu0
    %v160 = vadd.f32 %v127, %v159
    %v161 = vpop.f32.mrf.mxu0
    %v162 = vadd.f32 %v127, %v161
    %163 = vdwg.mxu0
    %164 = vmatpush.bf16.msra.mxu0 0
    %165 = vmatpush.bf16.msra.mxu0 0
    %166 = vmatpush.bf16.msra.mxu0 0
    %167 = vmatpush.bf16.msra.mxu0 0
    %168 = vmatpush.bf16.msra.mxu0 0
    %169 = vmatpush.bf16.msra.mxu0 0
    %170 = vmatpush.bf16.msra.mxu0 0
    %171 = vmatpush.bf16.msra.mxu0 %v143
    %172 = vmatmul.bf16.gmra.mxu0 %v148
    %v173 = vpop.f32.mrf.mxu0
    %v174 = vadd.f32 %v128, %v173
    %v175 = vpop.f32.mrf.mxu0
    %v176 = vadd.f32 %v128, %v175
    %177 = vdwg.mxu0
    %v178 = vld [vmem:[%s2] sm:$0xff]
    %v179 = vld [vmem:[%s2 + $0x8] sm:$0xff]
    %v180 = vld [vmem:[%s2 + $0x10] sm:$0xff]
    %v181 = vld [vmem:[%s2 + $0x18] sm:$0xff]
    %v182 = vld [vmem:[%s2 + $0x20] sm:$0xff]
    %v183 = vld [vmem:[%s2 + $0x28] sm:$0xff]
    %v184 = vld [vmem:[%s2 + $0x30] sm:$0xff]
    %v185 = vld [vmem:[%s2 + $0x38] sm:$0xff]
    %v187 = vrot.slane %v176, 6
    %v197 = vunpack.c.l.b16 %v178
    %v198 = vunpack.c.h.b16 %v178
    %v199 = vunpack.c.l.b16 %v179
    %v200 = vunpack.c.h.b16 %v179
    %v201 = vunpack.c.l.b16 %v180
    %v202 = vunpack.c.h.b16 %v180
    %v203 = vunpack.c.l.b16 %v181
    %v204 = vunpack.c.h.b16 %v181
    %v205 = vunpack.c.l.b16 %v182
    %v206 = vunpack.c.h.b16 %v182
    %v207 = vunpack.c.l.b16 %v183
    %v208 = vunpack.c.h.b16 %v183
    %v209 = vunpack.c.l.b16 %v184
    %v210 = vunpack.c.h.b16 %v184
    %v211 = vunpack.c.l.b16 %v185
    %v212 = vunpack.c.h.b16 %v185
    %v213 = vpack.c.b16 %v199, %v197
    %v214 = vpack.c.b16 %v200, %v198
    %v215 = vpack.c.b16 %v203, %v201
    %v216 = vpack.c.b16 %v204, %v202
    %v217 = vpack.c.b16 %v207, %v205
    %v218 = vpack.c.b16 %v208, %v206
    %v219 = vpack.c.b16 %v211, %v209
    %v220 = vpack.c.b16 %v212, %v210
    %vm229 = vcmask 523264
    %v231 = vsel %vm229, 0, 0
    %233 = vmatpush.bf16.msra.mxu0 0
    %234 = vmatpush.bf16.msra.mxu0 0
    %235 = vmatpush.bf16.msra.mxu0 0
    %236 = vmatpush.bf16.msra.mxu0 0
    %237 = vmatpush.bf16.msra.mxu0 %v219
    %238 = vmatpush.bf16.msra.mxu0 %v217
    %239 = vmatpush.bf16.msra.mxu0 %v215
    %240 = vmatpush.bf16.msra.mxu0 %v213
    %241 = vmatmul.bf16.gmra.mxu0 %v231
    %v242 = vpop.f32.mrf.mxu0
    %v243 = vadd.f32 0.0, %v242
    %v244 = vpop.f32.mrf.mxu0
    %245 = vdwg.mxu0
    %246 = vmatpush.bf16.msra.mxu0 0
    %247 = vmatpush.bf16.msra.mxu0 0
    %248 = vmatpush.bf16.msra.mxu0 0
    %249 = vmatpush.bf16.msra.mxu0 0
    %250 = vmatpush.bf16.msra.mxu0 %v220
    %251 = vmatpush.bf16.msra.mxu0 %v218
    %252 = vmatpush.bf16.msra.mxu0 %v216
    %253 = vmatpush.bf16.msra.mxu0 %v214
    %254 = vmatmul.bf16.gmra.mxu0 %v231
    %v255 = vpop.f32.mrf.mxu0
    %v256 = vadd.f32 0.0, %v255
    %v257 = vpop.f32.mrf.mxu0
    %258 = vdwg.mxu0
    %v259 = vadd.f32 %v160, %v243
    %v260 = vadd.f32 %v187, %v256
    %v261 = vxor.u32 %v259, 2147483648
    %v262 = vxor.u32 %v260, 2147483648
    %v263 = vmul.f32 %v261, 1.442695
    %v264 = vpow.pop %v263
    %v265 = vmul.f32 %v262, 1.442695
    %v266 = vpow.pop %v265
    %v267 = vadd.f32 %v264, 1.0
    %v268 = vadd.f32 %v266, 1.0
    %v269 = vrcp.pop %v267
    %v270 = vmul.f32 %v267, %v269
    %v271 = vsub.f32 1.0, %v270
    %v272 = vmul.f32 %v269, %v271
    %v273 = vadd.f32 %v269, %v272
    %vm274 = vweird.f32 %v267
    %vm275 = vweird.f32 %v269
    %vm276 = vmor %vm274, %vm275
    %v277 = vsel %vm276, %v269, %v273
    %v278 = vand.u32 2147483647, %v267
    %vm279 = vcmp.eq.f32.partialorder %v278, 8.507059e+37
    %v280 = vand.u32 %v267, 2147483648
    %v281 = vor.u32 1.1754944e-38, %v280
    %v282 = vsel %vm279, %v281, %v277
    %v283 = vmul.f32 1.0, %v282
    %v284 = vrcp.pop %v268
    %v285 = vmul.f32 %v268, %v284
    %v286 = vsub.f32 1.0, %v285
    %v287 = vmul.f32 %v284, %v286
    %v288 = vadd.f32 %v284, %v287
    %vm289 = vweird.f32 %v268
    %vm290 = vweird.f32 %v284
    %vm291 = vmor %vm289, %vm290
    %v292 = vsel %vm291, %v284, %v288
    %v293 = vand.u32 2147483647, %v268
    %vm294 = vcmp.eq.f32.partialorder %v293, 8.507059e+37
    %v295 = vand.u32 %v268, 2147483648
    %v296 = vor.u32 1.1754944e-38, %v295
    %v297 = vsel %vm294, %v296, %v292
    %v298 = vmul.f32 1.0, %v297
    %v299 = vtanh.pop %v259
    %v300 = vtanh.pop %v260
    %v301 = vmul.f32 %v283, 0.0
    %303 = vrot.lane.b32.xlu0 %v299, 64
    %v304 = vpop.permute.xlu0 %303
    %v306 = vmul.f32 %v283, %v304
    %308 = vrot.lane.b32.xlu0 %v306, 32
    %v309 = vpop.permute.xlu0 %308
    %v311 = vadd.f32 %v301, %v309
    %v312 = vtanh.pop %v311
    %314 = vrot.lane.b32.xlu0 %v312, 64
    %v315 = vpop.permute.xlu0 %314
    %v317 = vmul.f32 %v283, %v315
    %v318 = vmul.f32 %v298, 0.0
    %320 = vrot.lane.b32.xlu0 %v300, 64
    %v321 = vpop.permute.xlu0 %320
    %v323 = vmul.f32 %v298, %v321
    %325 = vrot.lane.b32.xlu0 %v323, 32
    %v326 = vpop.permute.xlu0 %325
    %v328 = vadd.f32 %v318, %v326
    %v329 = vtanh.pop %v328
    %331 = vrot.lane.b32.xlu0 %v329, 64
    %v332 = vpop.permute.xlu0 %331
    %v334 = vmul.f32 %v298, %v332
    %336 = vrot.lane.b32.xlu0 %v317, 32
    %v337 = vpop.permute.xlu0 %336
    %340 = vrot.lane.b32.xlu0 %v334, 64
    %v341 = vpop.permute.xlu0 %340
    %vm343 = vcmask 261120
    %v344 = vsel %vm343, %v337, %v341
    %v345 = vrot.slane %v176, 2
    %v347 = vpack.c.bf16 %v344, %v344
    %v349 = vsel %vm229, %v347, 0
    %351 = vmatpush.bf16.msra.mxu0 0
    %352 = vmatpush.bf16.msra.mxu0 0
    %353 = vmatpush.bf16.msra.mxu0 0
    %354 = vmatpush.bf16.msra.mxu0 0
    %355 = vmatpush.bf16.msra.mxu0 %v219
    %356 = vmatpush.bf16.msra.mxu0 %v217
    %357 = vmatpush.bf16.msra.mxu0 %v215
    %358 = vmatpush.bf16.msra.mxu0 %v213
    %359 = vmatmul.bf16.gmra.mxu0 %v349
    %v360 = vpop.f32.mrf.mxu0
    %v361 = vadd.f32 0.0, %v360
    %v362 = vpop.f32.mrf.mxu0
    %363 = vdwg.mxu0
    %364 = vmatpush.bf16.msra.mxu0 0
    %365 = vmatpush.bf16.msra.mxu0 0
    %366 = vmatpush.bf16.msra.mxu0 0
    %367 = vmatpush.bf16.msra.mxu0 0
    %368 = vmatpush.bf16.msra.mxu0 %v220
    %369 = vmatpush.bf16.msra.mxu0 %v218
    %370 = vmatpush.bf16.msra.mxu0 %v216
    %371 = vmatpush.bf16.msra.mxu0 %v214
    %372 = vmatmul.bf16.gmra.mxu0 %v349
    %v373 = vpop.f32.mrf.mxu0
    %v374 = vadd.f32 0.0, %v373
    %v375 = vpop.f32.mrf.mxu0
    %376 = vdwg.mxu0
    %v379 = vrot.slane %v361, 6
    %v380 = vrot.slane %v374, 6
    %v383 = vadd.f32 %v160, %v379
    %v384 = vadd.f32 %v345, %v380
    %v385 = vxor.u32 %v383, 2147483648
    %v386 = vxor.u32 %v384, 2147483648
    %v387 = vmul.f32 %v385, 1.442695
    %v388 = vpow.pop %v387
    %v389 = vmul.f32 %v386, 1.442695
    %v390 = vpow.pop %v389
    %v391 = vadd.f32 %v388, 1.0
    %v392 = vadd.f32 %v390, 1.0
    %v393 = vrcp.pop %v391
    %v394 = vmul.f32 %v391, %v393
    %v395 = vsub.f32 1.0, %v394
    %v396 = vmul.f32 %v393, %v395
    %v397 = vadd.f32 %v393, %v396
    %vm398 = vweird.f32 %v391
    %vm399 = vweird.f32 %v393
    %vm400 = vmor %vm398, %vm399
    %v401 = vsel %vm400, %v393, %v397
    %v402 = vand.u32 2147483647, %v391
    %vm403 = vcmp.eq.f32.partialorder %v402, 8.507059e+37
    %v404 = vand.u32 %v391, 2147483648
    %v405 = vor.u32 1.1754944e-38, %v404
    %v406 = vsel %vm403, %v405, %v401
    %v407 = vmul.f32 1.0, %v406
    %v408 = vrcp.pop %v392
    %v409 = vmul.f32 %v392, %v408
    %v410 = vsub.f32 1.0, %v409
    %v411 = vmul.f32 %v408, %v410
    %v412 = vadd.f32 %v408, %v411
    %vm413 = vweird.f32 %v392
    %vm414 = vweird.f32 %v408
    %vm415 = vmor %vm413, %vm414
    %v416 = vsel %vm415, %v408, %v412
    %v417 = vand.u32 2147483647, %v392
    %vm418 = vcmp.eq.f32.partialorder %v417, 8.507059e+37
    %v419 = vand.u32 %v392, 2147483648
    %v420 = vor.u32 1.1754944e-38, %v419
    %v421 = vsel %vm418, %v420, %v416
    %v422 = vmul.f32 1.0, %v421
    %v423 = vtanh.pop %v383
    %v424 = vtanh.pop %v384
    %v426 = vrot.slane %v311, 6
    %v428 = vmul.f32 %v407, %v426
    %430 = vrot.lane.b32.xlu0 %v423, 64
    %v431 = vpop.permute.xlu0 %430
    %v433 = vmul.f32 %v407, %v431
    %435 = vrot.lane.b32.xlu0 %v433, 32
    %v436 = vpop.permute.xlu0 %435
    %v438 = vadd.f32 %v428, %v436
    %v439 = vtanh.pop %v438
    %441 = vrot.lane.b32.xlu0 %v439, 64
    %v442 = vpop.permute.xlu0 %441
    %v444 = vmul.f32 %v407, %v442
    %v446 = vrot.slane %v328, 6
    %v448 = vmul.f32 %v422, %v446
    %450 = vrot.lane.b32.xlu0 %v424, 64
    %v451 = vpop.permute.xlu0 %450
    %v453 = vmul.f32 %v422, %v451
    %455 = vrot.lane.b32.xlu0 %v453, 32
    %v456 = vpop.permute.xlu0 %455
    %v458 = vadd.f32 %v448, %v456
    %v459 = vtanh.pop %v458
    %461 = vrot.lane.b32.xlu0 %v459, 64
    %v462 = vpop.permute.xlu0 %461
    %v464 = vmul.f32 %v422, %v462
    %466 = vrot.lane.b32.xlu0 %v444, 32
    %v467 = vpop.permute.xlu0 %466
    %470 = vrot.lane.b32.xlu0 %v464, 64
    %v471 = vpop.permute.xlu0 %470
    %v473 = vsel %vm343, %v467, %v471
    %v474 = vpack.c.bf16 %v473, %v473
    %v476 = vrot.slane %v474, 1
    %v478 = vsel %vm229, %v476, 0
    %480 = vmatpush.bf16.msra.mxu0 0
    %481 = vmatpush.bf16.msra.mxu0 0
    %482 = vmatpush.bf16.msra.mxu0 0
    %483 = vmatpush.bf16.msra.mxu0 0
    %484 = vmatpush.bf16.msra.mxu0 %v219
    %485 = vmatpush.bf16.msra.mxu0 %v217
    %486 = vmatpush.bf16.msra.mxu0 %v215
    %487 = vmatpush.bf16.msra.mxu0 %v213
    %488 = vmatmul.bf16.gmra.mxu0 %v478
    %v489 = vpop.f32.mrf.mxu0
    %v490 = vadd.f32 0.0, %v489
    %v491 = vpop.f32.mrf.mxu0
    %492 = vdwg.mxu0
    %493 = vmatpush.bf16.msra.mxu0 0
    %494 = vmatpush.bf16.msra.mxu0 0
    %495 = vmatpush.bf16.msra.mxu0 0
    %496 = vmatpush.bf16.msra.mxu0 0
    %497 = vmatpush.bf16.msra.mxu0 %v220
    %498 = vmatpush.bf16.msra.mxu0 %v218
    %499 = vmatpush.bf16.msra.mxu0 %v216
    %500 = vmatpush.bf16.msra.mxu0 %v214
    %501 = vmatmul.bf16.gmra.mxu0 %v478
    %v502 = vpop.f32.mrf.mxu0
    %v503 = vadd.f32 0.0, %v502
    %v504 = vpop.f32.mrf.mxu0
    %505 = vdwg.mxu0
    %v508 = vrot.slane %v490, 4
    %v509 = vrot.slane %v503, 4
    %v512 = vadd.f32 %v160, %v508
    %v513 = vadd.f32 %v187, %v509
    %v514 = vxor.u32 %v512, 2147483648
    %v515 = vxor.u32 %v513, 2147483648
    %v516 = vmul.f32 %v514, 1.442695
    %v517 = vpow.pop %v516
    %v518 = vmul.f32 %v515, 1.442695
    %v519 = vpow.pop %v518
    %v520 = vadd.f32 %v517, 1.0
    %v521 = vadd.f32 %v519, 1.0
    %v522 = vrcp.pop %v520
    %v523 = vmul.f32 %v520, %v522
    %v524 = vsub.f32 1.0, %v523
    %v525 = vmul.f32 %v522, %v524
    %v526 = vadd.f32 %v522, %v525
    %vm527 = vweird.f32 %v520
    %vm528 = vweird.f32 %v522
    %vm529 = vmor %vm527, %vm528
    %v530 = vsel %vm529, %v522, %v526
    %v531 = vand.u32 2147483647, %v520
    %vm532 = vcmp.eq.f32.partialorder %v531, 8.507059e+37
    %v533 = vand.u32 %v520, 2147483648
    %v534 = vor.u32 1.1754944e-38, %v533
    %v535 = vsel %vm532, %v534, %v530
    %v536 = vmul.f32 1.0, %v535
    %v537 = vrcp.pop %v521
    %v538 = vmul.f32 %v521, %v537
    %v539 = vsub.f32 1.0, %v538
    %v540 = vmul.f32 %v537, %v539
    %v541 = vadd.f32 %v537, %v540
    %vm542 = vweird.f32 %v521
    %vm543 = vweird.f32 %v537
    %vm544 = vmor %vm542, %vm543
    %v545 = vsel %vm544, %v537, %v541
    %v546 = vand.u32 2147483647, %v521
    %vm547 = vcmp.eq.f32.partialorder %v546, 8.507059e+37
    %v548 = vand.u32 %v521, 2147483648
    %v549 = vor.u32 1.1754944e-38, %v548
    %v550 = vsel %vm547, %v549, %v545
    %v551 = vmul.f32 1.0, %v550
    %v552 = vtanh.pop %v512
    %v553 = vtanh.pop %v513
    %v555 = vrot.slane %v438, 6
    %v557 = vmul.f32 %v536, %v555
    %559 = vrot.lane.b32.xlu0 %v552, 64
    %v560 = vpop.permute.xlu0 %559
    %v562 = vmul.f32 %v536, %v560
    %564 = vrot.lane.b32.xlu0 %v562, 32
    %v565 = vpop.permute.xlu0 %564
    %v567 = vadd.f32 %v557, %v565
    %v568 = vtanh.pop %v567
    %570 = vrot.lane.b32.xlu0 %v568, 64
    %v571 = vpop.permute.xlu0 %570
    %v573 = vmul.f32 %v536, %v571
    %v575 = vrot.slane %v458, 6
    %v577 = vmul.f32 %v551, %v575
    %579 = vrot.lane.b32.xlu0 %v553, 64
    %v580 = vpop.permute.xlu0 %579
    %v582 = vmul.f32 %v551, %v580
    %584 = vrot.lane.b32.xlu0 %v582, 32
    %v585 = vpop.permute.xlu0 %584
    %v587 = vadd.f32 %v577, %v585
    %v588 = vtanh.pop %v587
    %590 = vrot.lane.b32.xlu0 %v588, 64
    %v591 = vpop.permute.xlu0 %590
    %v593 = vmul.f32 %v551, %v591
    %595 = vrot.lane.b32.xlu0 %v573, 32
    %v596 = vpop.permute.xlu0 %595
    %599 = vrot.lane.b32.xlu0 %v593, 64
    %v600 = vpop.permute.xlu0 %599
    %v602 = vsel %vm343, %v596, %v600
    %v603 = vpack.c.bf16 %v602, %v602
    %v605 = vrot.slane %v603, 2
    %v607 = vsel %vm229, %v605, 0
    %609 = vmatpush.bf16.msra.mxu0 0
    %610 = vmatpush.bf16.msra.mxu0 0
    %611 = vmatpush.bf16.msra.mxu0 0
    %612 = vmatpush.bf16.msra.mxu0 0
    %613 = vmatpush.bf16.msra.mxu0 %v219
    %614 = vmatpush.bf16.msra.mxu0 %v217
    %615 = vmatpush.bf16.msra.mxu0 %v215
    %616 = vmatpush.bf16.msra.mxu0 %v213
    %617 = vmatmul.bf16.gmra.mxu0 %v607
    %v618 = vpop.f32.mrf.mxu0
    %v619 = vadd.f32 0.0, %v618
    %v620 = vpop.f32.mrf.mxu0
    %621 = vdwg.mxu0
    %622 = vmatpush.bf16.msra.mxu0 0
    %623 = vmatpush.bf16.msra.mxu0 0
    %624 = vmatpush.bf16.msra.mxu0 0
    %625 = vmatpush.bf16.msra.mxu0 0
    %626 = vmatpush.bf16.msra.mxu0 %v220
    %627 = vmatpush.bf16.msra.mxu0 %v218
    %628 = vmatpush.bf16.msra.mxu0 %v216
    %629 = vmatpush.bf16.msra.mxu0 %v214
    %630 = vmatmul.bf16.gmra.mxu0 %v607
    %v631 = vpop.f32.mrf.mxu0
    %v632 = vadd.f32 0.0, %v631
    %v633 = vpop.f32.mrf.mxu0
    %634 = vdwg.mxu0
    %v637 = vrot.slane %v619, 2
    %v638 = vrot.slane %v632, 2
    %v641 = vadd.f32 %v160, %v637
    %v642 = vadd.f32 %v345, %v638
    %v643 = vxor.u32 %v641, 2147483648
    %v644 = vxor.u32 %v642, 2147483648
    %v645 = vmul.f32 %v643, 1.442695
    %v646 = vpow.pop %v645
    %v647 = vmul.f32 %v644, 1.442695
    %v648 = vpow.pop %v647
    %v649 = vadd.f32 %v646, 1.0
    %v650 = vadd.f32 %v648, 1.0
    %v651 = vrcp.pop %v649
    %v652 = vmul.f32 %v649, %v651
    %v653 = vsub.f32 1.0, %v652
    %v654 = vmul.f32 %v651, %v653
    %v655 = vadd.f32 %v651, %v654
    %vm656 = vweird.f32 %v649
    %vm657 = vweird.f32 %v651
    %vm658 = vmor %vm656, %vm657
    %v659 = vsel %vm658, %v651, %v655
    %v660 = vand.u32 2147483647, %v649
    %vm661 = vcmp.eq.f32.partialorder %v660, 8.507059e+37
    %v662 = vand.u32 %v649, 2147483648
    %v663 = vor.u32 1.1754944e-38, %v662
    %v664 = vsel %vm661, %v663, %v659
    %v665 = vmul.f32 1.0, %v664
    %v666 = vrcp.pop %v650
    %v667 = vmul.f32 %v650, %v666
    %v668 = vsub.f32 1.0, %v667
    %v669 = vmul.f32 %v666, %v668
    %v670 = vadd.f32 %v666, %v669
    %vm671 = vweird.f32 %v650
    %vm672 = vweird.f32 %v666
    %vm673 = vmor %vm671, %vm672
    %v674 = vsel %vm673, %v666, %v670
    %v675 = vand.u32 2147483647, %v650
    %vm676 = vcmp.eq.f32.partialorder %v675, 8.507059e+37
    %v677 = vand.u32 %v650, 2147483648
    %v678 = vor.u32 1.1754944e-38, %v677
    %v679 = vsel %vm676, %v678, %v674
    %v680 = vmul.f32 1.0, %v679
    %v681 = vtanh.pop %v641
    %v682 = vtanh.pop %v642
    %v684 = vrot.slane %v567, 6
    %v686 = vmul.f32 %v665, %v684
    %688 = vrot.lane.b32.xlu0 %v681, 64
    %v689 = vpop.permute.xlu0 %688
    %v691 = vmul.f32 %v665, %v689
    %693 = vrot.lane.b32.xlu0 %v691, 32
    %v694 = vpop.permute.xlu0 %693
    %v696 = vadd.f32 %v686, %v694
    %v697 = vtanh.pop %v696
    %699 = vrot.lane.b32.xlu0 %v697, 64
    %v700 = vpop.permute.xlu0 %699
    %v702 = vmul.f32 %v665, %v700
    %v704 = vrot.slane %v587, 6
    %v706 = vmul.f32 %v680, %v704
    %708 = vrot.lane.b32.xlu0 %v682, 64
    %v709 = vpop.permute.xlu0 %708
    %v711 = vmul.f32 %v680, %v709
    %713 = vrot.lane.b32.xlu0 %v711, 32
    %v714 = vpop.permute.xlu0 %713
    %v716 = vadd.f32 %v706, %v714
    %v717 = vtanh.pop %v716
    %719 = vrot.lane.b32.xlu0 %v717, 64
    %v720 = vpop.permute.xlu0 %719
    %v722 = vmul.f32 %v680, %v720
    %724 = vrot.lane.b32.xlu0 %v702, 32
    %v725 = vpop.permute.xlu0 %724
    %728 = vrot.lane.b32.xlu0 %v722, 64
    %v729 = vpop.permute.xlu0 %728
    %v731 = vsel %vm343, %v725, %v729
    %v733 = vrot.slane %v174, 6
    %v735 = vpack.c.bf16 %v731, %v731
    %v737 = vrot.slane %v735, 3
    %v739 = vsel %vm229, %v737, 0
    %741 = vmatpush.bf16.msra.mxu0 0
    %742 = vmatpush.bf16.msra.mxu0 0
    %743 = vmatpush.bf16.msra.mxu0 0
    %744 = vmatpush.bf16.msra.mxu0 0
    %745 = vmatpush.bf16.msra.mxu0 %v219
    %746 = vmatpush.bf16.msra.mxu0 %v217
    %747 = vmatpush.bf16.msra.mxu0 %v215
    %748 = vmatpush.bf16.msra.mxu0 %v213
    %749 = vmatmul.bf16.gmra.mxu0 %v739
    %v750 = vpop.f32.mrf.mxu0
    %v751 = vadd.f32 0.0, %v750
    %v752 = vpop.f32.mrf.mxu0
    %753 = vdwg.mxu0
    %754 = vmatpush.bf16.msra.mxu0 0
    %755 = vmatpush.bf16.msra.mxu0 0
    %756 = vmatpush.bf16.msra.mxu0 0
    %757 = vmatpush.bf16.msra.mxu0 0
    %758 = vmatpush.bf16.msra.mxu0 %v220
    %759 = vmatpush.bf16.msra.mxu0 %v218
    %760 = vmatpush.bf16.msra.mxu0 %v216
    %761 = vmatpush.bf16.msra.mxu0 %v214
    %762 = vmatmul.bf16.gmra.mxu0 %v739
    %v763 = vpop.f32.mrf.mxu0
    %v764 = vadd.f32 0.0, %v763
    %v765 = vpop.f32.mrf.mxu0
    %766 = vdwg.mxu0
    %v767 = vadd.f32 %v162, %v751
    %v768 = vadd.f32 %v733, %v764
    %v769 = vxor.u32 %v767, 2147483648
    %v770 = vxor.u32 %v768, 2147483648
    %v771 = vmul.f32 %v769, 1.442695
    %v772 = vpow.pop %v771
    %v773 = vmul.f32 %v770, 1.442695
    %v774 = vpow.pop %v773
    %v775 = vadd.f32 %v772, 1.0
    %v776 = vadd.f32 %v774, 1.0
    %v777 = vrcp.pop %v775
    %v778 = vmul.f32 %v775, %v777
    %v779 = vsub.f32 1.0, %v778
    %v780 = vmul.f32 %v777, %v779
    %v781 = vadd.f32 %v777, %v780
    %vm782 = vweird.f32 %v775
    %vm783 = vweird.f32 %v777
    %vm784 = vmor %vm782, %vm783
    %v785 = vsel %vm784, %v777, %v781
    %v786 = vand.u32 2147483647, %v775
    %vm787 = vcmp.eq.f32.partialorder %v786, 8.507059e+37
    %v788 = vand.u32 %v775, 2147483648
    %v789 = vor.u32 1.1754944e-38, %v788
    %v790 = vsel %vm787, %v789, %v785
    %v791 = vmul.f32 1.0, %v790
    %v792 = vrcp.pop %v776
    %v793 = vmul.f32 %v776, %v792
    %v794 = vsub.f32 1.0, %v793
    %v795 = vmul.f32 %v792, %v794
    %v796 = vadd.f32 %v792, %v795
    %vm797 = vweird.f32 %v776
    %vm798 = vweird.f32 %v792
    %vm799 = vmor %vm797, %vm798
    %v800 = vsel %vm799, %v792, %v796
    %v801 = vand.u32 2147483647, %v776
    %vm802 = vcmp.eq.f32.partialorder %v801, 8.507059e+37
    %v803 = vand.u32 %v776, 2147483648
    %v804 = vor.u32 1.1754944e-38, %v803
    %v805 = vsel %vm802, %v804, %v800
    %v806 = vmul.f32 1.0, %v805
    %v807 = vtanh.pop %v767
    %v808 = vtanh.pop %v768
    %v810 = vrot.slane %v696, 6
    %v812 = vmul.f32 %v791, %v810
    %814 = vrot.lane.b32.xlu0 %v807, 64
    %v815 = vpop.permute.xlu0 %814
    %v817 = vmul.f32 %v791, %v815
    %819 = vrot.lane.b32.xlu0 %v817, 32
    %v820 = vpop.permute.xlu0 %819
    %v822 = vadd.f32 %v812, %v820
    %v823 = vtanh.pop %v822
    %825 = vrot.lane.b32.xlu0 %v823, 64
    %v826 = vpop.permute.xlu0 %825
    %v828 = vmul.f32 %v791, %v826
    %v830 = vrot.slane %v716, 6
    %v832 = vmul.f32 %v806, %v830
    %834 = vrot.lane.b32.xlu0 %v808, 64
    %v835 = vpop.permute.xlu0 %834
    %v837 = vmul.f32 %v806, %v835
    %839 = vrot.lane.b32.xlu0 %v837, 32
    %v840 = vpop.permute.xlu0 %839
    %v842 = vadd.f32 %v832, %v840
    %v843 = vtanh.pop %v842
    %845 = vrot.lane.b32.xlu0 %v843, 64
    %v846 = vpop.permute.xlu0 %845
    %v848 = vmul.f32 %v806, %v846
    %850 = vrot.lane.b32.xlu0 %v828, 32
    %v851 = vpop.permute.xlu0 %850
    %854 = vrot.lane.b32.xlu0 %v848, 64
    %v855 = vpop.permute.xlu0 %854
    %v857 = vsel %vm343, %v851, %v855
    %v858 = vrot.slane %v174, 2
    %v860 = vpack.c.bf16 %v857, %v857
    %v862 = vsel %vm229, %v860, 0
    %864 = vmatpush.bf16.msra.mxu0 0
    %865 = vmatpush.bf16.msra.mxu0 0
    %866 = vmatpush.bf16.msra.mxu0 0
    %867 = vmatpush.bf16.msra.mxu0 0
    %868 = vmatpush.bf16.msra.mxu0 %v219
    %869 = vmatpush.bf16.msra.mxu0 %v217
    %870 = vmatpush.bf16.msra.mxu0 %v215
    %871 = vmatpush.bf16.msra.mxu0 %v213
    %872 = vmatmul.bf16.gmra.mxu0 %v862
    %v873 = vpop.f32.mrf.mxu0
    %v874 = vadd.f32 0.0, %v873
    %v875 = vpop.f32.mrf.mxu0
    %876 = vdwg.mxu0
    %877 = vmatpush.bf16.msra.mxu0 0
    %878 = vmatpush.bf16.msra.mxu0 0
    %879 = vmatpush.bf16.msra.mxu0 0
    %880 = vmatpush.bf16.msra.mxu0 0
    %881 = vmatpush.bf16.msra.mxu0 %v220
    %882 = vmatpush.bf16.msra.mxu0 %v218
    %883 = vmatpush.bf16.msra.mxu0 %v216
    %884 = vmatpush.bf16.msra.mxu0 %v214
    %885 = vmatmul.bf16.gmra.mxu0 %v862
    %v886 = vpop.f32.mrf.mxu0
    %v887 = vadd.f32 0.0, %v886
    %v888 = vpop.f32.mrf.mxu0
    %889 = vdwg.mxu0
    %v892 = vrot.slane %v874, 6
    %v893 = vrot.slane %v887, 6
    %v896 = vadd.f32 %v162, %v892
    %v897 = vadd.f32 %v858, %v893
    %v898 = vxor.u32 %v896, 2147483648
    %v899 = vxor.u32 %v897, 2147483648
    %v900 = vmul.f32 %v898, 1.442695
    %v901 = vpow.pop %v900
    %v902 = vmul.f32 %v899, 1.442695
    %v903 = vpow.pop %v902
    %v904 = vadd.f32 %v901, 1.0
    %v905 = vadd.f32 %v903, 1.0
    %v906 = vrcp.pop %v904
    %v907 = vmul.f32 %v904, %v906
    %v908 = vsub.f32 1.0, %v907
    %v909 = vmul.f32 %v906, %v908
    %v910 = vadd.f32 %v906, %v909
    %vm911 = vweird.f32 %v904
    %vm912 = vweird.f32 %v906
    %vm913 = vmor %vm911, %vm912
    %v914 = vsel %vm913, %v906, %v910
    %v915 = vand.u32 2147483647, %v904
    %vm916 = vcmp.eq.f32.partialorder %v915, 8.507059e+37
    %v917 = vand.u32 %v904, 2147483648
    %v918 = vor.u32 1.1754944e-38, %v917
    %v919 = vsel %vm916, %v918, %v914
    %v920 = vmul.f32 1.0, %v919
    %v921 = vrcp.pop %v905
    %v922 = vmul.f32 %v905, %v921
    %v923 = vsub.f32 1.0, %v922
    %v924 = vmul.f32 %v921, %v923
    %v925 = vadd.f32 %v921, %v924
    %vm926 = vweird.f32 %v905
    %vm927 = vweird.f32 %v921
    %vm928 = vmor %vm926, %vm927
    %v929 = vsel %vm928, %v921, %v925
    %v930 = vand.u32 2147483647, %v905
    %vm931 = vcmp.eq.f32.partialorder %v930, 8.507059e+37
    %v932 = vand.u32 %v905, 2147483648
    %v933 = vor.u32 1.1754944e-38, %v932
    %v934 = vsel %vm931, %v933, %v929
    %v935 = vmul.f32 1.0, %v934
    %v936 = vtanh.pop %v896
    %v937 = vtanh.pop %v897
    %v939 = vrot.slane %v822, 6
    %v941 = vmul.f32 %v920, %v939
    %943 = vrot.lane.b32.xlu0 %v936, 64
    %v944 = vpop.permute.xlu0 %943
    %v946 = vmul.f32 %v920, %v944
    %948 = vrot.lane.b32.xlu0 %v946, 32
    %v949 = vpop.permute.xlu0 %948
    %v951 = vadd.f32 %v941, %v949
    %v952 = vtanh.pop %v951
    %954 = vrot.lane.b32.xlu0 %v952, 64
    %v955 = vpop.permute.xlu0 %954
    %v957 = vmul.f32 %v920, %v955
    %v959 = vrot.slane %v842, 6
    %v961 = vmul.f32 %v935, %v959
    %963 = vrot.lane.b32.xlu0 %v937, 64
    %v964 = vpop.permute.xlu0 %963
    %v966 = vmul.f32 %v935, %v964
    %968 = vrot.lane.b32.xlu0 %v966, 32
    %v969 = vpop.permute.xlu0 %968
    %v971 = vadd.f32 %v961, %v969
    %v972 = vtanh.pop %v971
    %974 = vrot.lane.b32.xlu0 %v972, 64
    %v975 = vpop.permute.xlu0 %974
    %v977 = vmul.f32 %v935, %v975
    %979 = vrot.lane.b32.xlu0 %v957, 32
    %v980 = vpop.permute.xlu0 %979
    %983 = vrot.lane.b32.xlu0 %v977, 64
    %v984 = vpop.permute.xlu0 %983
    %v986 = vsel %vm343, %v980, %v984
    %v987 = vpack.c.bf16 %v986, %v986
    %v989 = vrot.slane %v987, 1
    %v991 = vsel %vm229, %v989, 0
    %993 = vmatpush.bf16.msra.mxu0 0
    %994 = vmatpush.bf16.msra.mxu0 0
    %995 = vmatpush.bf16.msra.mxu0 0
    %996 = vmatpush.bf16.msra.mxu0 0
    %997 = vmatpush.bf16.msra.mxu0 %v219
    %998 = vmatpush.bf16.msra.mxu0 %v217
    %999 = vmatpush.bf16.msra.mxu0 %v215
    %1000 = vmatpush.bf16.msra.mxu0 %v213
    %1001 = vmatmul.bf16.gmra.mxu0 %v991
    %v1002 = vpop.f32.mrf.mxu0
    %v1003 = vadd.f32 0.0, %v1002
    %v1004 = vpop.f32.mrf.mxu0
    %1005 = vdwg.mxu0
    %1006 = vmatpush.bf16.msra.mxu0 0
    %1007 = vmatpush.bf16.msra.mxu0 0
    %1008 = vmatpush.bf16.msra.mxu0 0
    %1009 = vmatpush.bf16.msra.mxu0 0
    %1010 = vmatpush.bf16.msra.mxu0 %v220
    %1011 = vmatpush.bf16.msra.mxu0 %v218
    %1012 = vmatpush.bf16.msra.mxu0 %v216
    %1013 = vmatpush.bf16.msra.mxu0 %v214
    %1014 = vmatmul.bf16.gmra.mxu0 %v991
    %v1015 = vpop.f32.mrf.mxu0
    %v1016 = vadd.f32 0.0, %v1015
    %v1017 = vpop.f32.mrf.mxu0
    %1018 = vdwg.mxu0
    %v1021 = vrot.slane %v1003, 4
    %v1022 = vrot.slane %v1016, 4
    %v1025 = vadd.f32 %v162, %v1021
    %v1026 = vadd.f32 %v733, %v1022
    %v1027 = vxor.u32 %v1025, 2147483648
    %v1028 = vxor.u32 %v1026, 2147483648
    %v1029 = vmul.f32 %v1027, 1.442695
    %v1030 = vpow.pop %v1029
    %v1031 = vmul.f32 %v1028, 1.442695
    %v1032 = vpow.pop %v1031
    %v1033 = vadd.f32 %v1030, 1.0
    %v1034 = vadd.f32 %v1032, 1.0
    %v1035 = vrcp.pop %v1033
    %v1036 = vmul.f32 %v1033, %v1035
    %v1037 = vsub.f32 1.0, %v1036
    %v1038 = vmul.f32 %v1035, %v1037
    %v1039 = vadd.f32 %v1035, %v1038
    %vm1040 = vweird.f32 %v1033
    %vm1041 = vweird.f32 %v1035
    %vm1042 = vmor %vm1040, %vm1041
    %v1043 = vsel %vm1042, %v1035, %v1039
    %v1044 = vand.u32 2147483647, %v1033
    %vm1045 = vcmp.eq.f32.partialorder %v1044, 8.507059e+37
    %v1046 = vand.u32 %v1033, 2147483648
    %v1047 = vor.u32 1.1754944e-38, %v1046
    %v1048 = vsel %vm1045, %v1047, %v1043
    %v1049 = vmul.f32 1.0, %v1048
    %v1050 = vrcp.pop %v1034
    %v1051 = vmul.f32 %v1034, %v1050
    %v1052 = vsub.f32 1.0, %v1051
    %v1053 = vmul.f32 %v1050, %v1052
    %v1054 = vadd.f32 %v1050, %v1053
    %vm1055 = vweird.f32 %v1034
    %vm1056 = vweird.f32 %v1050
    %vm1057 = vmor %vm1055, %vm1056
    %v1058 = vsel %vm1057, %v1050, %v1054
    %v1059 = vand.u32 2147483647, %v1034
    %vm1060 = vcmp.eq.f32.partialorder %v1059, 8.507059e+37
    %v1061 = vand.u32 %v1034, 2147483648
    %v1062 = vor.u32 1.1754944e-38, %v1061
    %v1063 = vsel %vm1060, %v1062, %v1058
    %v1064 = vmul.f32 1.0, %v1063
    %v1065 = vtanh.pop %v1025
    %v1066 = vtanh.pop %v1026
    %v1068 = vrot.slane %v951, 6
    %v1070 = vmul.f32 %v1049, %v1068
    %1072 = vrot.lane.b32.xlu0 %v1065, 64
    %v1073 = vpop.permute.xlu0 %1072
    %v1075 = vmul.f32 %v1049, %v1073
    %1077 = vrot.lane.b32.xlu0 %v1075, 32
    %v1078 = vpop.permute.xlu0 %1077
    %v1080 = vadd.f32 %v1070, %v1078
    %v1081 = vtanh.pop %v1080
    %1083 = vrot.lane.b32.xlu0 %v1081, 64
    %v1084 = vpop.permute.xlu0 %1083
    %v1086 = vmul.f32 %v1049, %v1084
    %v1088 = vrot.slane %v971, 6
    %v1090 = vmul.f32 %v1064, %v1088
    %1092 = vrot.lane.b32.xlu0 %v1066, 64
    %v1093 = vpop.permute.xlu0 %1092
    %v1095 = vmul.f32 %v1064, %v1093
    %1097 = vrot.lane.b32.xlu0 %v1095, 32
    %v1098 = vpop.permute.xlu0 %1097
    %v1100 = vadd.f32 %v1090, %v1098
    %v1101 = vtanh.pop %v1100
    %1103 = vrot.lane.b32.xlu0 %v1101, 64
    %v1104 = vpop.permute.xlu0 %1103
    %v1106 = vmul.f32 %v1064, %v1104
    %1108 = vrot.lane.b32.xlu0 %v1086, 32
    %v1109 = vpop.permute.xlu0 %1108
    %1112 = vrot.lane.b32.xlu0 %v1106, 64
    %v1113 = vpop.permute.xlu0 %1112
    %v1115 = vsel %vm343, %v1109, %v1113
    %v1116 = vpack.c.bf16 %v1115, %v1115
    %v1118 = vrot.slane %v1116, 2
    %v1120 = vsel %vm229, %v1118, 0
    %1122 = vmatpush.bf16.msra.mxu0 0
    %1123 = vmatpush.bf16.msra.mxu0 0
    %1124 = vmatpush.bf16.msra.mxu0 0
    %1125 = vmatpush.bf16.msra.mxu0 0
    %1126 = vmatpush.bf16.msra.mxu0 %v219
    %1127 = vmatpush.bf16.msra.mxu0 %v217
    %1128 = vmatpush.bf16.msra.mxu0 %v215
    %1129 = vmatpush.bf16.msra.mxu0 %v213
    %1130 = vmatmul.bf16.gmra.mxu0 %v1120
    %v1131 = vpop.f32.mrf.mxu0
    %v1132 = vadd.f32 0.0, %v1131
    %v1133 = vpop.f32.mrf.mxu0
    %1134 = vdwg.mxu0
    %1135 = vmatpush.bf16.msra.mxu0 0
    %1136 = vmatpush.bf16.msra.mxu0 0
    %1137 = vmatpush.bf16.msra.mxu0 0
    %1138 = vmatpush.bf16.msra.mxu0 0
    %1139 = vmatpush.bf16.msra.mxu0 %v220
    %1140 = vmatpush.bf16.msra.mxu0 %v218
    %1141 = vmatpush.bf16.msra.mxu0 %v216
    %1142 = vmatpush.bf16.msra.mxu0 %v214
    %1143 = vmatmul.bf16.gmra.mxu0 %v1120
    %v1144 = vpop.f32.mrf.mxu0
    %v1145 = vadd.f32 0.0, %v1144
    %v1146 = vpop.f32.mrf.mxu0
    %1147 = vdwg.mxu0
    %v1150 = vrot.slane %v1132, 2
    %v1151 = vrot.slane %v1145, 2
    %v1154 = vadd.f32 %v162, %v1150
    %v1155 = vadd.f32 %v858, %v1151
    %v1156 = vxor.u32 %v1154, 2147483648
    %v1157 = vxor.u32 %v1155, 2147483648
    %v1158 = vmul.f32 %v1156, 1.442695
    %v1159 = vpow.pop %v1158
    %v1160 = vmul.f32 %v1157, 1.442695
    %v1161 = vpow.pop %v1160
    %v1162 = vadd.f32 %v1159, 1.0
    %v1163 = vadd.f32 %v1161, 1.0
    %v1164 = vrcp.pop %v1162
    %v1165 = vmul.f32 %v1162, %v1164
    %v1166 = vsub.f32 1.0, %v1165
    %v1167 = vmul.f32 %v1164, %v1166
    %v1168 = vadd.f32 %v1164, %v1167
    %vm1169 = vweird.f32 %v1162
    %vm1170 = vweird.f32 %v1164
    %vm1171 = vmor %vm1169, %vm1170
    %v1172 = vsel %vm1171, %v1164, %v1168
    %v1173 = vand.u32 2147483647, %v1162
    %vm1174 = vcmp.eq.f32.partialorder %v1173, 8.507059e+37
    %v1175 = vand.u32 %v1162, 2147483648
    %v1176 = vor.u32 1.1754944e-38, %v1175
    %v1177 = vsel %vm1174, %v1176, %v1172
    %v1178 = vmul.f32 1.0, %v1177
    %v1179 = vrcp.pop %v1163
    %v1180 = vmul.f32 %v1163, %v1179
    %v1181 = vsub.f32 1.0, %v1180
    %v1182 = vmul.f32 %v1179, %v1181
    %v1183 = vadd.f32 %v1179, %v1182
    %vm1184 = vweird.f32 %v1163
    %vm1185 = vweird.f32 %v1179
    %vm1186 = vmor %vm1184, %vm1185
    %v1187 = vsel %vm1186, %v1179, %v1183
    %v1188 = vand.u32 2147483647, %v1163
    %vm1189 = vcmp.eq.f32.partialorder %v1188, 8.507059e+37
    %v1190 = vand.u32 %v1163, 2147483648
    %v1191 = vor.u32 1.1754944e-38, %v1190
    %v1192 = vsel %vm1189, %v1191, %v1187
    %v1193 = vmul.f32 1.0, %v1192
    %v1194 = vtanh.pop %v1154
    %v1195 = vtanh.pop %v1155
    %v1197 = vrot.slane %v1080, 6
    %v1199 = vmul.f32 %v1178, %v1197
    %1201 = vrot.lane.b32.xlu0 %v1194, 64
    %v1202 = vpop.permute.xlu0 %1201
    %v1204 = vmul.f32 %v1178, %v1202
    %1206 = vrot.lane.b32.xlu0 %v1204, 32
    %v1207 = vpop.permute.xlu0 %1206
    %v1209 = vadd.f32 %v1199, %v1207
    %v1210 = vtanh.pop %v1209
    %1212 = vrot.lane.b32.xlu0 %v1210, 64
    %v1213 = vpop.permute.xlu0 %1212
    %v1215 = vmul.f32 %v1178, %v1213
    %v1217 = vrot.slane %v1100, 6
    %v1219 = vmul.f32 %v1193, %v1217
    %1221 = vrot.lane.b32.xlu0 %v1195, 64
    %v1222 = vpop.permute.xlu0 %1221
    %v1224 = vmul.f32 %v1193, %v1222
    %1226 = vrot.lane.b32.xlu0 %v1224, 32
    %v1227 = vpop.permute.xlu0 %1226
    %v1229 = vadd.f32 %v1219, %v1227
    %v1230 = vtanh.pop %v1229
    %1232 = vrot.lane.b32.xlu0 %v1230, 64
    %v1233 = vpop.permute.xlu0 %1232
    %v1235 = vmul.f32 %v1193, %v1233
    %v1237 = vrot.slane %v1235, 6
    %1238 = vrot.lane.b32.xlu0 %v1237, 64
    %v1239 = vpop.permute.xlu0 %1238
    %v1241 = vsel %vm343, %v337, %v1239
    %v1242 = vrot.slane %v1106, 2
    %1243 = vrot.lane.b32.xlu0 %v1242, 64
    %v1244 = vpop.permute.xlu0 %1243
    %v1246 = vsel %vm343, %v467, %v1244
    %v1247 = vrot.slane %v977, 6
    %1248 = vrot.lane.b32.xlu0 %v1247, 64
    %v1249 = vpop.permute.xlu0 %1248
    %v1251 = vsel %vm343, %v596, %v1249
    %v1252 = vrot.slane %v848, 2
    %1253 = vrot.lane.b32.xlu0 %v1252, 64
    %v1254 = vpop.permute.xlu0 %1253
    %v1256 = vsel %vm343, %v725, %v1254
    %v1257 = vrot.slane %v722, 6
    %1258 = vrot.lane.b32.xlu0 %v1257, 64
    %v1259 = vpop.permute.xlu0 %1258
    %v1261 = vsel %vm343, %v851, %v1259
    %v1262 = vrot.slane %v593, 2
    %1263 = vrot.lane.b32.xlu0 %v1262, 64
    %v1264 = vpop.permute.xlu0 %1263
    %v1266 = vsel %vm343, %v980, %v1264
    %v1267 = vrot.slane %v464, 6
    %1268 = vrot.lane.b32.xlu0 %v1267, 64
    %v1269 = vpop.permute.xlu0 %1268
    %v1271 = vsel %vm343, %v1109, %v1269
    %1273 = vrot.lane.b32.xlu0 %v1215, 32
    %v1274 = vpop.permute.xlu0 %1273
    %v1276 = vrot.slane %v334, 2
    %1277 = vrot.lane.b32.xlu0 %v1276, 64
    %v1278 = vpop.permute.xlu0 %1277
    %v1280 = vsel %vm343, %v1274, %v1278
    %vm1281 = vcmask 1041408
    %v1282 = vsel %vm1281, %v1241, %v1246
    %vm1283 = vcmask 1043456
    %v1284 = vsel %vm1283, %v1282, %v1251
    %vm1285 = vcmask 1045504
    %v1286 = vsel %vm1285, %v1284, %v1256
    %v1287 = vsel %vm1281, %v1261, %v1266
    %v1288 = vsel %vm1283, %v1287, %v1271
    %v1289 = vsel %vm1285, %v1288, %v1280
    %v1290 = vpack.c.bf16 %v1286, %v1286
    %v1291 = vpack.c.bf16 %v1289, %v1289
    %v1292 = vld [vmem:[#allocation3] sm:$0xf]
    %v1293 = vld [vmem:[#allocation3 + $0x4] sm:$0xf]
    %v1294 = vld [vmem:[#allocation3 + $0x8] sm:$0xf]
    %v1295 = vld [vmem:[#allocation3 + $0xc] sm:$0xf]
    %v1296 = vld [vmem:[#allocation3 + $0x10] sm:$0xf]
    %v1297 = vld [vmem:[#allocation3 + $0x14] sm:$0xf]
    %v1298 = vld [vmem:[#allocation3 + $0x18] sm:$0xf]
    %v1299 = vld [vmem:[#allocation3 + $0x1c] sm:$0xf]
    %v1300 = vld [vmem:[%s6] sm:$0x1]
    %v1302 = vperm.slane %v1300, 0
    %v1306 = vunpack.c.l.b16 %v1290
    %v1307 = vunpack.c.l.b16 %v1291
    %v1308 = vpack.c.b16 %v1307, %v1306
    %v1317 = vunpack.c.l.b16 %v1292
    %v1318 = vunpack.c.l.b16 %v1293
    %v1319 = vunpack.c.l.b16 %v1294
    %v1320 = vunpack.c.l.b16 %v1295
    %v1321 = vunpack.c.l.b16 %v1296
    %v1322 = vunpack.c.l.b16 %v1297
    %v1323 = vunpack.c.l.b16 %v1298
    %v1324 = vunpack.c.l.b16 %v1299
    %v1325 = vpack.c.b16 %v1318, %v1317
    %v1326 = vpack.c.b16 %v1320, %v1319
    %v1327 = vpack.c.b16 %v1322, %v1321
    %v1328 = vpack.c.b16 %v1324, %v1323
    %v1334 = vsel %vm229, %v1308, 0
    %1336 = vmatpush.bf16.msra.mxu0 0
    %1337 = vmatpush.bf16.msra.mxu0 0
    %1338 = vmatpush.bf16.msra.mxu0 0
    %1339 = vmatpush.bf16.msra.mxu0 0
    %1340 = vmatpush.bf16.msra.mxu0 %v1328
    %1341 = vmatpush.bf16.msra.mxu0 %v1327
    %1342 = vmatpush.bf16.msra.mxu0 %v1326
    %1343 = vmatpush.bf16.msra.mxu0 %v1325
    %1344 = vmatmul.bf16.gmra.mxu0 %v1334
    %v1345 = vpop.f32.mrf.mxu0
    %v1346 = vadd.f32 %v1302, %v1345
    %v1347 = vpop.f32.mrf.mxu0
    %v1348 = vadd.f32 %v1302, %v1347
    %1349 = vdwg.mxu0
    %v1350 = vld [vmem:[#allocation5] sm:$0xf]
    %v1351 = vld [vmem:[#allocation5 + $0x4] sm:$0xf]
    %v1352 = vld [vmem:[#allocation5 + $0x8] sm:$0xf]
    %v1353 = vld [vmem:[#allocation5 + $0xc] sm:$0xf]
    %v1358 = vunpack.c.l.b16 %v1350
    %v1359 = vunpack.c.l.b16 %v1351
    %v1360 = vunpack.c.l.b16 %v1352
    %v1361 = vunpack.c.l.b16 %v1353
    %v1362 = vpack.c.b16 %v1359, %v1358
    %v1363 = vpack.c.b16 %v1361, %v1360
    %v1366 = vsel %vm343, 0, 0
    %1368 = vmatpush.bf16.msra.mxu0 0
    %1369 = vmatpush.bf16.msra.mxu0 0
    %1370 = vmatpush.bf16.msra.mxu0 0
    %1371 = vmatpush.bf16.msra.mxu0 0
    %1372 = vmatpush.bf16.msra.mxu0 0
    %1373 = vmatpush.bf16.msra.mxu0 0
    %1374 = vmatpush.bf16.msra.mxu0 %v1363
    %1375 = vmatpush.bf16.msra.mxu0 %v1362
    %1376 = vmatmul.bf16.gmra.mxu0 %v1366
    %v1377 = vpop.f32.mrf.mxu0
    %v1378 = vadd.f32 0.0, %v1377
    %v1379 = vpop.f32.mrf.mxu0
    %1380 = vdwg.mxu0
    %v1381 = vadd.f32 %v1346, %v1378
    %v1382 = vxor.u32 %v1381, 2147483648
    %v1383 = vmul.f32 %v1382, 1.442695
    %v1384 = vpow.pop %v1383
    %v1385 = vadd.f32 %v1384, 1.0
    %v1386 = vrcp.pop %v1385
    %v1387 = vmul.f32 %v1385, %v1386
    %v1388 = vsub.f32 1.0, %v1387
    %v1389 = vmul.f32 %v1386, %v1388
    %v1390 = vadd.f32 %v1386, %v1389
    %vm1391 = vweird.f32 %v1385
    %vm1392 = vweird.f32 %v1386
    %vm1393 = vmor %vm1391, %vm1392
    %v1394 = vsel %vm1393, %v1386, %v1390
    %v1395 = vand.u32 2147483647, %v1385
    %vm1396 = vcmp.eq.f32.partialorder %v1395, 8.507059e+37
    %v1397 = vand.u32 %v1385, 2147483648
    %v1398 = vor.u32 1.1754944e-38, %v1397
    %v1399 = vsel %vm1396, %v1398, %v1394
    %v1400 = vmul.f32 1.0, %v1399
    %v1401 = vtanh.pop %v1381
    %v1402 = vmul.f32 %v1400, 0.0
    %1404 = vrot.lane.b32.xlu0 %v1401, 64
    %v1405 = vpop.permute.xlu0 %1404
    %v1407 = vmul.f32 %v1400, %v1405
    %1409 = vrot.lane.b32.xlu0 %v1407, 32
    %v1410 = vpop.permute.xlu0 %1409
    %v1412 = vadd.f32 %v1402, %v1410
    %v1413 = vtanh.pop %v1412
    %1415 = vrot.lane.b32.xlu0 %v1413, 64
    %v1416 = vpop.permute.xlu0 %1415
    %v1418 = vmul.f32 %v1400, %v1416
    %v1419 = vpack.c.bf16 %v1418, %v1418
    %1421 = vrot.lane.b32.xlu0 %v1419, 32
    %v1422 = vpop.permute.xlu0 %1421
    %v1424 = vsel %vm343, %v1422, 0
    %1426 = vmatpush.bf16.msra.mxu0 0
    %1427 = vmatpush.bf16.msra.mxu0 0
    %1428 = vmatpush.bf16.msra.mxu0 0
    %1429 = vmatpush.bf16.msra.mxu0 0
    %1430 = vmatpush.bf16.msra.mxu0 0
    %1431 = vmatpush.bf16.msra.mxu0 0
    %1432 = vmatpush.bf16.msra.mxu0 %v1363
    %1433 = vmatpush.bf16.msra.mxu0 %v1362
    %1434 = vmatmul.bf16.gmra.mxu0 %v1424
    %v1435 = vpop.f32.mrf.mxu0
    %v1436 = vadd.f32 0.0, %v1435
    %v1437 = vpop.f32.mrf.mxu0
    %1438 = vdwg.mxu0
    %v1440 = vrot.slane %v1436, 6
    %v1442 = vadd.f32 %v1346, %v1440
    %v1443 = vxor.u32 %v1442, 2147483648
    %v1444 = vmul.f32 %v1443, 1.442695
    %v1445 = vpow.pop %v1444
    %v1446 = vadd.f32 %v1445, 1.0
    %v1447 = vrcp.pop %v1446
    %v1448 = vmul.f32 %v1446, %v1447
    %v1449 = vsub.f32 1.0, %v1448
    %v1450 = vmul.f32 %v1447, %v1449
    %v1451 = vadd.f32 %v1447, %v1450
    %vm1452 = vweird.f32 %v1446
    %vm1453 = vweird.f32 %v1447
    %vm1454 = vmor %vm1452, %vm1453
    %v1455 = vsel %vm1454, %v1447, %v1451
    %v1456 = vand.u32 2147483647, %v1446
    %vm1457 = vcmp.eq.f32.partialorder %v1456, 8.507059e+37
    %v1458 = vand.u32 %v1446, 2147483648
    %v1459 = vor.u32 1.1754944e-38, %v1458
    %v1460 = vsel %vm1457, %v1459, %v1455
    %v1461 = vmul.f32 1.0, %v1460
    %v1462 = vtanh.pop %v1442
    %v1464 = vrot.slane %v1412, 6
    %v1466 = vmul.f32 %v1461, %v1464
    %1468 = vrot.lane.b32.xlu0 %v1462, 64
    %v1469 = vpop.permute.xlu0 %1468
    %v1471 = vmul.f32 %v1461, %v1469
    %1473 = vrot.lane.b32.xlu0 %v1471, 32
    %v1474 = vpop.permute.xlu0 %1473
    %v1476 = vadd.f32 %v1466, %v1474
    %v1477 = vtanh.pop %v1476
    %1479 = vrot.lane.b32.xlu0 %v1477, 64
    %v1480 = vpop.permute.xlu0 %1479
    %v1482 = vmul.f32 %v1461, %v1480
    %v1483 = vpack.c.bf16 %v1482, %v1482
    %v1485 = vrot.slane %v1483, 1
    %1486 = vrot.lane.b32.xlu0 %v1485, 32
    %v1487 = vpop.permute.xlu0 %1486
    %v1489 = vsel %vm343, %v1487, 0
    %1491 = vmatpush.bf16.msra.mxu0 0
    %1492 = vmatpush.bf16.msra.mxu0 0
    %1493 = vmatpush.bf16.msra.mxu0 0
    %1494 = vmatpush.bf16.msra.mxu0 0
    %1495 = vmatpush.bf16.msra.mxu0 0
    %1496 = vmatpush.bf16.msra.mxu0 0
    %1497 = vmatpush.bf16.msra.mxu0 %v1363
    %1498 = vmatpush.bf16.msra.mxu0 %v1362
    %1499 = vmatmul.bf16.gmra.mxu0 %v1489
    %v1500 = vpop.f32.mrf.mxu0
    %v1501 = vadd.f32 0.0, %v1500
    %v1502 = vpop.f32.mrf.mxu0
    %1503 = vdwg.mxu0
    %v1505 = vrot.slane %v1501, 4
    %v1507 = vadd.f32 %v1346, %v1505
    %v1508 = vxor.u32 %v1507, 2147483648
    %v1509 = vmul.f32 %v1508, 1.442695
    %v1510 = vpow.pop %v1509
    %v1511 = vadd.f32 %v1510, 1.0
    %v1512 = vrcp.pop %v1511
    %v1513 = vmul.f32 %v1511, %v1512
    %v1514 = vsub.f32 1.0, %v1513
    %v1515 = vmul.f32 %v1512, %v1514
    %v1516 = vadd.f32 %v1512, %v1515
    %vm1517 = vweird.f32 %v1511
    %vm1518 = vweird.f32 %v1512
    %vm1519 = vmor %vm1517, %vm1518
    %v1520 = vsel %vm1519, %v1512, %v1516
    %v1521 = vand.u32 2147483647, %v1511
    %vm1522 = vcmp.eq.f32.partialorder %v1521, 8.507059e+37
    %v1523 = vand.u32 %v1511, 2147483648
    %v1524 = vor.u32 1.1754944e-38, %v1523
    %v1525 = vsel %vm1522, %v1524, %v1520
    %v1526 = vmul.f32 1.0, %v1525
    %v1527 = vtanh.pop %v1507
    %v1529 = vrot.slane %v1476, 6
    %v1531 = vmul.f32 %v1526, %v1529
    %1533 = vrot.lane.b32.xlu0 %v1527, 64
    %v1534 = vpop.permute.xlu0 %1533
    %v1536 = vmul.f32 %v1526, %v1534
    %1538 = vrot.lane.b32.xlu0 %v1536, 32
    %v1539 = vpop.permute.xlu0 %1538
    %v1541 = vadd.f32 %v1531, %v1539
    %v1542 = vtanh.pop %v1541
    %1544 = vrot.lane.b32.xlu0 %v1542, 64
    %v1545 = vpop.permute.xlu0 %1544
    %v1547 = vmul.f32 %v1526, %v1545
    %v1548 = vpack.c.bf16 %v1547, %v1547
    %v1550 = vrot.slane %v1548, 2
    %1551 = vrot.lane.b32.xlu0 %v1550, 32
    %v1552 = vpop.permute.xlu0 %1551
    %v1554 = vsel %vm343, %v1552, 0
    %1556 = vmatpush.bf16.msra.mxu0 0
    %1557 = vmatpush.bf16.msra.mxu0 0
    %1558 = vmatpush.bf16.msra.mxu0 0
    %1559 = vmatpush.bf16.msra.mxu0 0
    %1560 = vmatpush.bf16.msra.mxu0 0
    %1561 = vmatpush.bf16.msra.mxu0 0
    %1562 = vmatpush.bf16.msra.mxu0 %v1363
    %1563 = vmatpush.bf16.msra.mxu0 %v1362
    %1564 = vmatmul.bf16.gmra.mxu0 %v1554
    %v1565 = vpop.f32.mrf.mxu0
    %v1566 = vadd.f32 0.0, %v1565
    %v1567 = vpop.f32.mrf.mxu0
    %1568 = vdwg.mxu0
    %v1570 = vrot.slane %v1566, 2
    %v1572 = vadd.f32 %v1346, %v1570
    %v1573 = vxor.u32 %v1572, 2147483648
    %v1574 = vmul.f32 %v1573, 1.442695
    %v1575 = vpow.pop %v1574
    %v1576 = vadd.f32 %v1575, 1.0
    %v1577 = vrcp.pop %v1576
    %v1578 = vmul.f32 %v1576, %v1577
    %v1579 = vsub.f32 1.0, %v1578
    %v1580 = vmul.f32 %v1577, %v1579
    %v1581 = vadd.f32 %v1577, %v1580
    %vm1582 = vweird.f32 %v1576
    %vm1583 = vweird.f32 %v1577
    %vm1584 = vmor %vm1582, %vm1583
    %v1585 = vsel %vm1584, %v1577, %v1581
    %v1586 = vand.u32 2147483647, %v1576
    %vm1587 = vcmp.eq.f32.partialorder %v1586, 8.507059e+37
    %v1588 = vand.u32 %v1576, 2147483648
    %v1589 = vor.u32 1.1754944e-38, %v1588
    %v1590 = vsel %vm1587, %v1589, %v1585
    %v1591 = vmul.f32 1.0, %v1590
    %v1592 = vtanh.pop %v1572
    %v1594 = vrot.slane %v1541, 6
    %v1596 = vmul.f32 %v1591, %v1594
    %1598 = vrot.lane.b32.xlu0 %v1592, 64
    %v1599 = vpop.permute.xlu0 %1598
    %v1601 = vmul.f32 %v1591, %v1599
    %1603 = vrot.lane.b32.xlu0 %v1601, 32
    %v1604 = vpop.permute.xlu0 %1603
    %v1606 = vadd.f32 %v1596, %v1604
    %v1607 = vtanh.pop %v1606
    %1609 = vrot.lane.b32.xlu0 %v1607, 64
    %v1610 = vpop.permute.xlu0 %1609
    %v1612 = vmul.f32 %v1591, %v1610
    %v1613 = vpack.c.bf16 %v1612, %v1612
    %v1615 = vrot.slane %v1613, 3
    %1616 = vrot.lane.b32.xlu0 %v1615, 32
    %v1617 = vpop.permute.xlu0 %1616
    %v1619 = vsel %vm343, %v1617, 0
    %1621 = vmatpush.bf16.msra.mxu0 0
    %1622 = vmatpush.bf16.msra.mxu0 0
    %1623 = vmatpush.bf16.msra.mxu0 0
    %1624 = vmatpush.bf16.msra.mxu0 0
    %1625 = vmatpush.bf16.msra.mxu0 0
    %1626 = vmatpush.bf16.msra.mxu0 0
    %1627 = vmatpush.bf16.msra.mxu0 %v1363
    %1628 = vmatpush.bf16.msra.mxu0 %v1362
    %1629 = vmatmul.bf16.gmra.mxu0 %v1619
    %v1630 = vpop.f32.mrf.mxu0
    %v1631 = vadd.f32 0.0, %v1630
    %v1632 = vpop.f32.mrf.mxu0
    %1633 = vdwg.mxu0
    %v1634 = vadd.f32 %v1348, %v1631
    %v1635 = vxor.u32 %v1634, 2147483648
    %v1636 = vmul.f32 %v1635, 1.442695
    %v1637 = vpow.pop %v1636
    %v1638 = vadd.f32 %v1637, 1.0
    %v1639 = vrcp.pop %v1638
    %v1640 = vmul.f32 %v1638, %v1639
    %v1641 = vsub.f32 1.0, %v1640
    %v1642 = vmul.f32 %v1639, %v1641
    %v1643 = vadd.f32 %v1639, %v1642
    %vm1644 = vweird.f32 %v1638
    %vm1645 = vweird.f32 %v1639
    %vm1646 = vmor %vm1644, %vm1645
    %v1647 = vsel %vm1646, %v1639, %v1643
    %v1648 = vand.u32 2147483647, %v1638
    %vm1649 = vcmp.eq.f32.partialorder %v1648, 8.507059e+37
    %v1650 = vand.u32 %v1638, 2147483648
    %v1651 = vor.u32 1.1754944e-38, %v1650
    %v1652 = vsel %vm1649, %v1651, %v1647
    %v1653 = vmul.f32 1.0, %v1652
    %v1654 = vtanh.pop %v1634
    %v1656 = vrot.slane %v1606, 6
    %v1658 = vmul.f32 %v1653, %v1656
    %1660 = vrot.lane.b32.xlu0 %v1654, 64
    %v1661 = vpop.permute.xlu0 %1660
    %v1663 = vmul.f32 %v1653, %v1661
    %1665 = vrot.lane.b32.xlu0 %v1663, 32
    %v1666 = vpop.permute.xlu0 %1665
    %v1668 = vadd.f32 %v1658, %v1666
    %v1669 = vtanh.pop %v1668
    %1671 = vrot.lane.b32.xlu0 %v1669, 64
    %v1672 = vpop.permute.xlu0 %1671
    %v1674 = vmul.f32 %v1653, %v1672
    %v1675 = vpack.c.bf16 %v1674, %v1674
    %1677 = vrot.lane.b32.xlu0 %v1675, 32
    %v1678 = vpop.permute.xlu0 %1677
    %v1680 = vsel %vm343, %v1678, 0
    %1682 = vmatpush.bf16.msra.mxu0 0
    %1683 = vmatpush.bf16.msra.mxu0 0
    %1684 = vmatpush.bf16.msra.mxu0 0
    %1685 = vmatpush.bf16.msra.mxu0 0
    %1686 = vmatpush.bf16.msra.mxu0 0
    %1687 = vmatpush.bf16.msra.mxu0 0
    %1688 = vmatpush.bf16.msra.mxu0 %v1363
    %1689 = vmatpush.bf16.msra.mxu0 %v1362
    %1690 = vmatmul.bf16.gmra.mxu0 %v1680
    %v1691 = vpop.f32.mrf.mxu0
    %v1692 = vadd.f32 0.0, %v1691
    %v1693 = vpop.f32.mrf.mxu0
    %1694 = vdwg.mxu0
    %v1696 = vrot.slane %v1692, 6
    %v1698 = vadd.f32 %v1348, %v1696
    %v1699 = vxor.u32 %v1698, 2147483648
    %v1700 = vmul.f32 %v1699, 1.442695
    %v1701 = vpow.pop %v1700
    %v1702 = vadd.f32 %v1701, 1.0
    %v1703 = vrcp.pop %v1702
    %v1704 = vmul.f32 %v1702, %v1703
    %v1705 = vsub.f32 1.0, %v1704
    %v1706 = vmul.f32 %v1703, %v1705
    %v1707 = vadd.f32 %v1703, %v1706
    %vm1708 = vweird.f32 %v1702
    %vm1709 = vweird.f32 %v1703
    %vm1710 = vmor %vm1708, %vm1709
    %v1711 = vsel %vm1710, %v1703, %v1707
    %v1712 = vand.u32 2147483647, %v1702
    %vm1713 = vcmp.eq.f32.partialorder %v1712, 8.507059e+37
    %v1714 = vand.u32 %v1702, 2147483648
    %v1715 = vor.u32 1.1754944e-38, %v1714
    %v1716 = vsel %vm1713, %v1715, %v1711
    %v1717 = vmul.f32 1.0, %v1716
    %v1718 = vtanh.pop %v1698
    %v1720 = vrot.slane %v1668, 6
    %v1722 = vmul.f32 %v1717, %v1720
    %1724 = vrot.lane.b32.xlu0 %v1718, 64
    %v1725 = vpop.permute.xlu0 %1724
    %v1727 = vmul.f32 %v1717, %v1725
    %1729 = vrot.lane.b32.xlu0 %v1727, 32
    %v1730 = vpop.permute.xlu0 %1729
    %v1732 = vadd.f32 %v1722, %v1730
    %v1733 = vtanh.pop %v1732
    %1735 = vrot.lane.b32.xlu0 %v1733, 64
    %v1736 = vpop.permute.xlu0 %1735
    %v1738 = vmul.f32 %v1717, %v1736
    %v1739 = vpack.c.bf16 %v1738, %v1738
    %v1741 = vrot.slane %v1739, 1
    %1742 = vrot.lane.b32.xlu0 %v1741, 32
    %v1743 = vpop.permute.xlu0 %1742
    %v1745 = vsel %vm343, %v1743, 0
    %1747 = vmatpush.bf16.msra.mxu0 0
    %1748 = vmatpush.bf16.msra.mxu0 0
    %1749 = vmatpush.bf16.msra.mxu0 0
    %1750 = vmatpush.bf16.msra.mxu0 0
    %1751 = vmatpush.bf16.msra.mxu0 0
    %1752 = vmatpush.bf16.msra.mxu0 0
    %1753 = vmatpush.bf16.msra.mxu0 %v1363
    %1754 = vmatpush.bf16.msra.mxu0 %v1362
    %1755 = vmatmul.bf16.gmra.mxu0 %v1745
    %v1756 = vpop.f32.mrf.mxu0
    %v1757 = vadd.f32 0.0, %v1756
    %v1758 = vpop.f32.mrf.mxu0
    %1759 = vdwg.mxu0
    %v1761 = vrot.slane %v1757, 4
    %v1763 = vadd.f32 %v1348, %v1761
    %v1764 = vxor.u32 %v1763, 2147483648
    %v1765 = vmul.f32 %v1764, 1.442695
    %v1766 = vpow.pop %v1765
    %v1767 = vadd.f32 %v1766, 1.0
    %v1768 = vrcp.pop %v1767
    %v1769 = vmul.f32 %v1767, %v1768
    %v1770 = vsub.f32 1.0, %v1769
    %v1771 = vmul.f32 %v1768, %v1770
    %v1772 = vadd.f32 %v1768, %v1771
    %vm1773 = vweird.f32 %v1767
    %vm1774 = vweird.f32 %v1768
    %vm1775 = vmor %vm1773, %vm1774
    %v1776 = vsel %vm1775, %v1768, %v1772
    %v1777 = vand.u32 2147483647, %v1767
    %vm1778 = vcmp.eq.f32.partialorder %v1777, 8.507059e+37
    %v1779 = vand.u32 %v1767, 2147483648
    %v1780 = vor.u32 1.1754944e-38, %v1779
    %v1781 = vsel %vm1778, %v1780, %v1776
    %v1782 = vmul.f32 1.0, %v1781
    %v1783 = vtanh.pop %v1763
    %v1785 = vrot.slane %v1732, 6
    %v1787 = vmul.f32 %v1782, %v1785
    %1789 = vrot.lane.b32.xlu0 %v1783, 64
    %v1790 = vpop.permute.xlu0 %1789
    %v1792 = vmul.f32 %v1782, %v1790
    %1794 = vrot.lane.b32.xlu0 %v1792, 32
    %v1795 = vpop.permute.xlu0 %1794
    %v1797 = vadd.f32 %v1787, %v1795
    %v1798 = vtanh.pop %v1797
    %1800 = vrot.lane.b32.xlu0 %v1798, 64
    %v1801 = vpop.permute.xlu0 %1800
    %v1803 = vmul.f32 %v1782, %v1801
    %v1804 = vpack.c.bf16 %v1803, %v1803
    %v1806 = vrot.slane %v1804, 2
    %1807 = vrot.lane.b32.xlu0 %v1806, 32
    %v1808 = vpop.permute.xlu0 %1807
    %v1810 = vsel %vm343, %v1808, 0
    %1812 = vmatpush.bf16.msra.mxu0 0
    %1813 = vmatpush.bf16.msra.mxu0 0
    %1814 = vmatpush.bf16.msra.mxu0 0
    %1815 = vmatpush.bf16.msra.mxu0 0
    %1816 = vmatpush.bf16.msra.mxu0 0
    %1817 = vmatpush.bf16.msra.mxu0 0
    %1818 = vmatpush.bf16.msra.mxu0 %v1363
    %1819 = vmatpush.bf16.msra.mxu0 %v1362
    %1820 = vmatmul.bf16.gmra.mxu0 %v1810
    %v1821 = vpop.f32.mrf.mxu0
    %v1822 = vadd.f32 0.0, %v1821
    %v1823 = vpop.f32.mrf.mxu0
    %1824 = vdwg.mxu0
    %v1826 = vrot.slane %v1822, 2
    %v1828 = vadd.f32 %v1348, %v1826
    %v1829 = vxor.u32 %v1828, 2147483648
    %v1830 = vmul.f32 %v1829, 1.442695
    %v1831 = vpow.pop %v1830
    %v1832 = vadd.f32 %v1831, 1.0
    %v1833 = vrcp.pop %v1832
    %v1834 = vmul.f32 %v1832, %v1833
    %v1835 = vsub.f32 1.0, %v1834
    %v1836 = vmul.f32 %v1833, %v1835
    %v1837 = vadd.f32 %v1833, %v1836
    %vm1838 = vweird.f32 %v1832
    %vm1839 = vweird.f32 %v1833
    %vm1840 = vmor %vm1838, %vm1839
    %v1841 = vsel %vm1840, %v1833, %v1837
    %v1842 = vand.u32 2147483647, %v1832
    %vm1843 = vcmp.eq.f32.partialorder %v1842, 8.507059e+37
    %v1844 = vand.u32 %v1832, 2147483648
    %v1845 = vor.u32 1.1754944e-38, %v1844
    %v1846 = vsel %vm1843, %v1845, %v1841
    %v1847 = vmul.f32 1.0, %v1846
    %v1848 = vtanh.pop %v1828
    %v1850 = vrot.slane %v1797, 6
    %v1852 = vmul.f32 %v1847, %v1850
    %1854 = vrot.lane.b32.xlu0 %v1848, 64
    %v1855 = vpop.permute.xlu0 %1854
    %v1857 = vmul.f32 %v1847, %v1855
    %1859 = vrot.lane.b32.xlu0 %v1857, 32
    %v1860 = vpop.permute.xlu0 %1859
    %v1862 = vadd.f32 %v1852, %v1860
    %v1863 = vtanh.pop %v1862
    %1865 = vrot.lane.b32.xlu0 %v1863, 64
    %v1866 = vpop.permute.xlu0 %1865
    %v1868 = vmul.f32 %v1847, %v1866
    %v1869 = vld [vmem:[#allocation7] sm:$0xf]
    %v1870 = vld [vmem:[#allocation7 + $0x4] sm:$0xf]
    %v1871 = vld [vmem:[#allocation7 + $0x8] sm:$0xf]
    %v1872 = vld [vmem:[#allocation7 + $0xc] sm:$0xf]
    %v1873 = vld [vmem:[#allocation7 + $0x10] sm:$0xf]
    %v1874 = vld [vmem:[#allocation7 + $0x14] sm:$0xf]
    %v1875 = vld [vmem:[#allocation7 + $0x18] sm:$0xf]
    %v1876 = vld [vmem:[#allocation7 + $0x1c] sm:$0xf]
    %v1877 = vld [vmem:[#allocation8] sm:$0x1]
    %v1879 = vperm.slane %v1877, 0
    %v1881 = vpack.c.b16 %v1307, %v1307
    %v1882 = vrot.slane %v1881, 3
    %v1891 = vunpack.c.l.b16 %v1869
    %v1892 = vunpack.c.l.b16 %v1870
    %v1893 = vunpack.c.l.b16 %v1871
    %v1894 = vunpack.c.l.b16 %v1872
    %v1895 = vunpack.c.l.b16 %v1873
    %v1896 = vunpack.c.l.b16 %v1874
    %v1897 = vunpack.c.l.b16 %v1875
    %v1898 = vunpack.c.l.b16 %v1876
    %v1899 = vpack.c.b16 %v1892, %v1891
    %v1900 = vpack.c.b16 %v1894, %v1893
    %v1901 = vpack.c.b16 %v1896, %v1895
    %v1902 = vpack.c.b16 %v1898, %v1897
    %v1908 = vsel %vm229, %v1882, 0
    %1910 = vmatpush.bf16.msra.mxu0 0
    %1911 = vmatpush.bf16.msra.mxu0 0
    %1912 = vmatpush.bf16.msra.mxu0 0
    %1913 = vmatpush.bf16.msra.mxu0 0
    %1914 = vmatpush.bf16.msra.mxu0 %v1902
    %1915 = vmatpush.bf16.msra.mxu0 %v1901
    %1916 = vmatpush.bf16.msra.mxu0 %v1900
    %1917 = vmatpush.bf16.msra.mxu0 %v1899
    %1918 = vmatmul.bf16.gmra.mxu0 %v1908
    %v1919 = vpop.f32.mrf.mxu0
    %v1920 = vadd.f32 %v1879, %v1919
    %v1921 = vpop.f32.mrf.mxu0
    %1922 = vdwg.mxu0
    %v1923 = vxor.u32 %v1920, 2147483648
    %v1924 = vmul.f32 %v1923, 1.442695
    %v1925 = vpow.pop %v1924
    %v1926 = vadd.f32 %v1925, 1.0
    %v1927 = vrcp.pop %v1926
    %v1928 = vmul.f32 %v1926, %v1927
    %v1929 = vsub.f32 1.0, %v1928
    %v1930 = vmul.f32 %v1927, %v1929
    %v1931 = vadd.f32 %v1927, %v1930
    %vm1932 = vweird.f32 %v1926
    %vm1933 = vweird.f32 %v1927
    %vm1934 = vmor %vm1932, %vm1933
    %v1935 = vsel %vm1934, %v1927, %v1931
    %v1936 = vand.u32 2147483647, %v1926
    %vm1937 = vcmp.eq.f32.partialorder %v1936, 8.507059e+37
    %v1938 = vand.u32 %v1926, 2147483648
    %v1939 = vor.u32 1.1754944e-38, %v1938
    %v1940 = vsel %vm1937, %v1939, %v1935
    %v1941 = vmul.f32 1.0, %v1940
    %v1942 = vtanh.pop %v1920
    %v1943 = vmul.f32 %v1941, 0.0
    %1945 = vrot.lane.b32.xlu0 %v1942, 64
    %v1946 = vpop.permute.xlu0 %1945
    %v1948 = vmul.f32 %v1941, %v1946
    %1950 = vrot.lane.b32.xlu0 %v1948, 32
    %v1951 = vpop.permute.xlu0 %1950
    %v1953 = vadd.f32 %v1943, %v1951
    %v1954 = vtanh.pop %v1953
    %1956 = vrot.lane.b32.xlu0 %v1954, 64
    %v1957 = vpop.permute.xlu0 %1956
    %v1959 = vmul.f32 %v1941, %v1957
    %1961 = vrot.lane.b32.xlu0 %v1868, 32
    %v1962 = vpop.permute.xlu0 %1961
    %v1965 = vrot.slane %v1959, 2
    %1966 = vrot.lane.b32.xlu0 %v1965, 64
    %v1967 = vpop.permute.xlu0 %1966
    %v1969 = vsel %vm343, %v1962, %v1967
    %v1970 = vld [vmem:[%s9] sm:$0xff]
    %v1971 = vld [vmem:[%s9 + $0x8] sm:$0xff]
    %v1972 = vld [vmem:[%s9 + $0x10] sm:$0xff]
    %v1973 = vld [vmem:[%s9 + $0x18] sm:$0xff]
    %v1974 = vld [vmem:[%s9 + $0x20] sm:$0xff]
    %v1975 = vld [vmem:[%s9 + $0x28] sm:$0xff]
    %v1976 = vld [vmem:[%s9 + $0x30] sm:$0xff]
    %v1977 = vld [vmem:[%s9 + $0x38] sm:$0xff]
    %v1978 = vld [vmem:[#allocation10] sm:$0x1]
    %v1980 = vperm.slane %v1978, 0
    %v1983 = vrot.slane %v1969, 6
    %v1984 = vsel %vm229, %v1983, 0
    %1986 = vmatpush.msra.mxu0 0.0
    %1987 = vmatpush.msra.mxu0 0.0
    %1988 = vmatpush.msra.mxu0 0.0
    %1989 = vmatpush.msra.mxu0 0.0
    %1990 = vmatpush.msra.mxu0 0.0
    %1991 = vmatpush.msra.mxu0 0.0
    %1992 = vmatpush.msra.mxu0 0.0
    %1993 = vmatpush.msra.mxu0 0.0
    %1994 = vmatpush.msra.mxu0 %v1977
    %1995 = vmatpush.msra.mxu0 %v1976
    %1996 = vmatpush.msra.mxu0 %v1975
    %1997 = vmatpush.msra.mxu0 %v1974
    %1998 = vmatpush.msra.mxu0 %v1973
    %1999 = vmatpush.msra.mxu0 %v1972
    %2000 = vmatpush.msra.mxu0 %v1971
    %2001 = vmatpush.msra.mxu0 %v1970
    %2002 = vmatmul.f32.gmra.mxu0 %v1984
    %v2003 = vpop.f32.mrf.mxu0
    %v2004 = vadd.f32 %v1980, %v2003
    %2005 = vdwg.mxu0
    %v2006 = vmax.f32 %v2004, 0.0
    %v2007 = vld [vmem:[%s11] sm:$0xff]
    %v2008 = vld [vmem:[%s11 + $0x8] sm:$0xff]
    %v2009 = vld [vmem:[#allocation2] sm:$0x1]
    %v2011 = vperm.slane %v2009, 0
    %v2014 = vsel %vm146, %v2006, 0
    %2016 = vmatpush.msra.mxu0 0.0
    %2017 = vmatpush.msra.mxu0 0.0
    %2018 = vmatpush.msra.mxu0 0.0
    %2019 = vmatpush.msra.mxu0 0.0
    %2020 = vmatpush.msra.mxu0 0.0
    %2021 = vmatpush.msra.mxu0 0.0
    %2022 = vmatpush.msra.mxu0 0.0
    %2023 = vmatpush.msra.mxu0 0.0
    %2024 = vmatpush.msra.mxu0 0.0
    %2025 = vmatpush.msra.mxu0 0.0
    %2026 = vmatpush.msra.mxu0 0.0
    %2027 = vmatpush.msra.mxu0 0.0
    %2028 = vmatpush.msra.mxu0 0.0
    %2029 = vmatpush.msra.mxu0 0.0
    %2030 = vmatpush.msra.mxu0 %v2008
    %2031 = vmatpush.msra.mxu0 %v2007
    %2032 = vmatmul.f32.gmra.mxu0 %v2014
    %v2033 = vpop.f32.mrf.mxu0
    %v2034 = vadd.f32 %v2011, %v2033
    %2035 = vdwg.mxu0
    %v2036 = vxor.u32 %v2034, 2147483648
    %v2037 = vmul.f32 %v2036, 1.442695
    %v2038 = vpow.pop %v2037
    %v2039 = vadd.f32 %v2038, 1.0
    %v2040 = vrcp.pop %v2039
    %v2041 = vmul.f32 %v2039, %v2040
    %v2042 = vsub.f32 1.0, %v2041
    %v2043 = vmul.f32 %v2040, %v2042
    %v2044 = vadd.f32 %v2040, %v2043
    %vm2045 = vweird.f32 %v2039
    %vm2046 = vweird.f32 %v2040
    %vm2047 = vmor %vm2045, %vm2046
    %v2048 = vsel %vm2047, %v2040, %v2044
    %v2049 = vand.u32 2147483647, %v2039
    %vm2050 = vcmp.eq.f32.partialorder %v2049, 8.507059e+37
    %v2051 = vand.u32 %v2039, 2147483648
    %v2052 = vor.u32 1.1754944e-38, %v2051
    %v2053 = vsel %vm2050, %v2052, %v2048
    %v2054 = vmul.f32 1.0, %v2053
    %vm2055 = vcmask 1024
    %2056 = vst.msk [vmem:[%s13] sm:$0x3] %vm2055, %v2054
    // Predicated region
    $region74: #{tpu_custom_call.1} parent=1 // pred_check
      _
    $region75: #{tpu_custom_call.1} parent=1 // pred_check_branch
      %2058 = sbr.rel (0) target = $region77
    $region76: #{tpu_custom_call.1} parent=1 // pred_region
      _
    $region77: #{tpu_custom_call.1} parent=1 // pred_fallthru
      _
    // Predicated region
    $region78: #{tpu_custom_call.1} parent=1 // pred_check
      _
    $region79: #{tpu_custom_call.1} parent=1 // pred_check_branch
      %2060 = sbr.rel (0) target = $region81
    $region80: #{tpu_custom_call.1} parent=1 // pred_region
      _
    $region81: #{tpu_custom_call.1} parent=1 // pred_fallthru
      _
    %2061 = vsyncpa [#allocation4], 1
    %2062 = vsyncpa [#allocation6], 1
    %2063 = vsyncpa [#allocation9], 1

</llo_original>
